<compile_context>
chip_gen: v7x
topology: tpu7x:2x2x1
jax: 0.10.0
libtpu: 0.0.40
codegen_flags: <defaults>
</compile_context>

<pallas_src>
import functools

import jax
import jax.numpy as jnp
from jax import lax
from jax.experimental import pallas as pl
from jax.experimental.pallas import tpu as pltpu


# ----------------------- BaseTransform.__init__ configuration -----------------------
IN_CHANNELS = 4          # Cin
OUT_CHANNELS = 8         # C
IMAGE_SIZE = (32, 64)    # (Hi, Wi)
FEATURE_SIZE = (4, 8)    # (Hf, Wf)
XBOUND = (-8.0, 8.0, 1.0)
YBOUND = (-8.0, 8.0, 1.0)
ZBOUND = (-20.0, 20.0, 40.0)
DBOUND = (1.0, 17.0, 1.0)


def gen_dx_bx(xbound, ybound, zbound):
    dx = [row[2] for row in (xbound, ybound, zbound)]
    bx = [row[0] + row[2] / 2.0 for row in (xbound, ybound, zbound)]
    nx = [int((row[1] - row[0]) / row[2]) for row in (xbound, ybound, zbound)]
    return dx, bx, nx


DX, BXC, NX = gen_dx_bx(XBOUND, YBOUND, ZBOUND)
NXV, NYV, NZV = NX
CVOX = [BXC[i] - DX[i] / 2.0 for i in range(3)]      # bx - dx/2
INV_DX = [1.0 / DX[i] for i in range(3)]             # host-side reciprocals (const fold)

Hi, Wi = IMAGE_SIZE
Hf, Wf = FEATURE_SIZE
DMIN, DMAX, DSTEP = DBOUND
D = int((DMAX - DMIN) / DSTEP)
Df = D * Hi * Wi // (256 * Hf * Wf)                  # "slightly-more-uniform" depth bins
HW = Hf * Wf                                         # feature pixels per camera (=32)
P = Df * HW                                          # pseudo points per camera (=128)
V = NZV * NXV * NYV                                  # voxels per batch element (=256)
LANE = 128
V_OUT = ((V + LANE - 1) // LANE) * LANE              # lane-dense padded voxel axis (=256)
V_CHUNK = LANE                                       # one 128-lane BEV chunk per grid step
NUM_VOX_CHUNKS = V_OUT // LANE                       # second (parallel) grid axis (=2)


def create_frustum():
    """(Df, Hf, Wf, 3) pseudo-point grid, same as BaseTransform.create_frustum."""
    ds = jnp.linspace(DMIN, DMAX - DSTEP, Df, dtype=jnp.float32).reshape(Df, 1, 1)
    ds = jnp.broadcast_to(ds, (Df, Hf, Wf))
    xs = jnp.linspace(0.0, Wi - 1, Wf, dtype=jnp.float32).reshape(1, 1, Wf)
    xs = jnp.broadcast_to(xs, (Df, Hf, Wf))
    ys = jnp.linspace(0.0, Hi - 1, Hf, dtype=jnp.float32).reshape(1, Hf, 1)
    ys = jnp.broadcast_to(ys, (Df, Hf, Wf))
    return jnp.stack([xs, ys, ds], axis=-1)


# ----------------------------- fused forward-pass kernel -----------------------------
def _fused_lss_kernel(m1_ref, m2_ref, t1_ref, t2_ref, fr_ref, x_ref, wt_ref, b_ref,
                      bev_ref, geom_ref, *, n_cams):
    b = pl.program_id(0)
    chunk_off = pl.program_id(1) * V_CHUNK            # first voxel id of this lane chunk

    # frustum, lane-dense: (1, P) rows with the P pseudo points on lanes
    fx = fr_ref[0:1, :]
    fy = fr_ref[1:2, :]
    fz = fr_ref[2:3, :]

    # voxel-id iota for this chunk (hoisted out of the camera loop)
    vox_iota = lax.broadcasted_iota(jnp.int32, (V_CHUNK, P), 0) + chunk_off

    # get_cam_feats stand-in: 1x1 conv (Cin -> C), all cameras at once, as Cin
    # broadcast-FMAs on the VPU (a K=4 MXU matmul is pure push/pop latency).
    x_all = x_ref[0]                                  # (Cin, n_cams*HW), channel-major
    feat_all = b_ref[...] + wt_ref[:, 0:1] * x_all[0:1, :]
    for cin in range(1, IN_CHANNELS):
        feat_all = feat_all + wt_ref[:, cin:cin + 1] * x_all[cin:cin + 1, :]
    # feat_all: (C, n_cams*HW), f32

    hit_blocks = []
    feat_blocks = []
    for n in range(n_cams):                           # static unroll; n_cams is tiny
        bn = b * n_cams + n

        # ---------------- get_geometry (lane-dense VPU, SMEM scalar coeffs) ----------
        px = fx - t1_ref[bn, 0]
        py = fy - t1_ref[bn, 1]
        pz = fz - t1_ref[bn, 2]
        # q = inv(post_rots) @ p
        qx = m1_ref[bn, 0] * px + m1_ref[bn, 1] * py + m1_ref[bn, 2] * pz
        qy = m1_ref[bn, 3] * px + m1_ref[bn, 4] * py + m1_ref[bn, 5] * pz
        qz = m1_ref[bn, 6] * px + m1_ref[bn, 7] * py + m1_ref[bn, 8] * pz
        # unproject: (x*z, y*z, z)
        ux, uy, uz = qx * qz, qy * qz, qz
        # r = (cam2lidar_rots @ inv(intrins)) @ u + cam2lidar_trans
        rx = m2_ref[bn, 0] * ux + m2_ref[bn, 1] * uy + m2_ref[bn, 2] * uz + t2_ref[bn, 0]
        ry = m2_ref[bn, 3] * ux + m2_ref[bn, 4] * uy + m2_ref[bn, 5] * uz + t2_ref[bn, 1]
        rz = m2_ref[bn, 6] * ux + m2_ref[bn, 7] * uy + m2_ref[bn, 8] * uz + t2_ref[bn, 2]

        # lane-dense geometry store: (3, P) full-128-lane rows, no select/where stack
        geom_ref[0, 0, n] = jnp.concatenate([rx, ry, rz], axis=0)

        # --------------- voxelization (trunc-toward-zero == torch .long()) -----------
        gx = ((rx - CVOX[0]) * INV_DX[0]).astype(jnp.int32)
        gy = ((ry - CVOX[1]) * INV_DX[1]).astype(jnp.int32)
        gz = ((rz - CVOX[2]) * INV_DX[2]).astype(jnp.int32)
        kept = (gx >= 0) & (gx < NXV) & (gy >= 0) & (gy < NYV) & (gz >= 0) & (gz < NZV)
        flat = (gz * NXV + gx) * NYV + gy             # local voxel id, (Z, X, Y) order
        flat = jnp.where(kept, flat, -1)              # dropped points never match iota

        # ----- 0/1 splat matrix for this chunk: hit[v, p] = [point p -> voxel v] -----
        # TODO(synk): on v6e/v7x cast hit (exact) and feat (lossy) to bf16 for native
        # MXU rate once the 1e-3-level end-to-end tolerance is deliberately relaxed.
        hit_blocks.append((flat == vox_iota).astype(jnp.float32))    # (V_CHUNK, P)

        # Df depth replication of the per-camera features, lane-tiled to match the
        # frustum point ordering p = d*HW + hw
        feat_n = feat_all[:, n * HW:(n + 1) * HW]                    # (C, HW)
        feat_blocks.append(jnp.concatenate([feat_n] * Df, axis=1))   # (C, P)

    # ---- bev_pool: ONE MXU matmul, K = n_cams*P; camera + depth sums ride in K -----
    hit_all = jnp.concatenate(hit_blocks, axis=1)     # (V_CHUNK, n_cams*P)
    feat_rep = jnp.concatenate(feat_blocks, axis=1)   # (C, n_cams*P)
    bev_ref[0] = jnp.dot(feat_rep, hit_all.T,         # (C, V_CHUNK), lane-dense store
                         preferred_element_type=jnp.float32)


def fused_transform_pallas(m1, m2, t1, t2, frustum_3p, x_cam, wt, b_col):
    batch = x_cam.shape[0]
    n_cams = x_cam.shape[2] // HW
    kernel = functools.partial(_fused_lss_kernel, n_cams=n_cams)
    return pl.pallas_call(
        kernel,
        out_shape=(
            jax.ShapeDtypeStruct((batch, OUT_CHANNELS, V_OUT), jnp.float32),
            # geometry is duplicated per voxel chunk so every output block is written
            # exactly once by exactly one grid step (safe under 2-axis "parallel")
            jax.ShapeDtypeStruct((batch, NUM_VOX_CHUNKS, n_cams, 3, P), jnp.float32)),
        grid=(batch, NUM_VOX_CHUNKS),
        in_specs=[pl.BlockSpec(memory_space=pltpu.MemorySpace.SMEM),   # inv(post_rots)  (BN,9)
                  pl.BlockSpec(memory_space=pltpu.MemorySpace.SMEM),   # combine         (BN,9)
                  pl.BlockSpec(memory_space=pltpu.MemorySpace.SMEM),   # post_trans      (BN,3)
                  pl.BlockSpec(memory_space=pltpu.MemorySpace.SMEM),   # cam2lidar_trans (BN,3)
                  pl.BlockSpec((3, P), lambda b, c: (0, 0)),           # frustum, lane-dense
                  pl.BlockSpec((1, IN_CHANNELS, n_cams * HW), lambda b, c: (b, 0, 0)),
                  pl.BlockSpec((OUT_CHANNELS, IN_CHANNELS), lambda b, c: (0, 0)),
                  pl.BlockSpec((OUT_CHANNELS, 1), lambda b, c: (0, 0))],
        out_specs=(pl.BlockSpec((1, OUT_CHANNELS, V_CHUNK), lambda b, c: (b, 0, c)),
                   pl.BlockSpec((1, 1, n_cams, 3, P), lambda b, c: (b, c, 0, 0, 0))),
        compiler_params=pltpu.CompilerParams(
            dimension_semantics=("parallel", "parallel")),
    )(m1, m2, t1, t2, frustum_3p, x_cam, wt, b_col)


# ------------------------------------ forward glue -----------------------------------
def base_transform_forward(imgs, geometries, frustum, w_conv, b_conv):
    B, N = imgs.shape[:2]
    BN = B * N

    intrins = geometries["camera_intrinsics"][..., :3, :3]
    post_rots = geometries["img_aug_matrix"][..., :3, :3]
    post_trans = geometries["img_aug_matrix"][..., :3, 3]
    c2l_rots = geometries["camera2lidar"][..., :3, :3]
    c2l_trans = geometries["camera2lidar"][..., :3, 3]

    # tiny batched 3x3 inverses + combine (setup, not hot path) stay in JAX glue
    inv_post = jnp.linalg.inv(post_rots)
    combine = jnp.matmul(c2l_rots, jnp.linalg.inv(intrins),
                         precision=jax.lax.Precision.HIGHEST)

    m1 = inv_post.reshape(BN, 9).astype(jnp.float32)
    m2 = combine.reshape(BN, 9).astype(jnp.float32)
    t1 = post_trans.reshape(BN, 3).astype(jnp.float32)
    t2 = c2l_trans.reshape(BN, 3).astype(jnp.float32)

    frustum_3p = frustum.reshape(P, 3).T.astype(jnp.float32)        # (3, P) lane-dense

    # TODO(synk): BaseTransform.get_cam_feats raises NotImplementedError in the base
    # class; deterministic stand-in = avg-pool to feature resolution + in-kernel 1x1
    # conv (Cin -> C); the Df depth replication is folded into the splat matmul.
    pooled = imgs.reshape(B, N, IN_CHANNELS, Hf, Hi // Hf, Wf, Wi // Wf).mean(axis=(4, 6))
    x_cam = (pooled.reshape(B, N, IN_CHANNELS, HW)
             .transpose(0, 2, 1, 3).reshape(B, IN_CHANNELS, N * HW).astype(jnp.float32))

    wt = w_conv.T.astype(jnp.float32)                               # (C, Cin)
    b_col = b_conv.reshape(OUT_CHANNELS, 1).astype(jnp.float32)

    bev, geom_raw = fused_transform_pallas(m1, m2, t1, t2, frustum_3p, x_cam, wt, b_col)

    # geometry back to the PyTorch layout (B, N, Df, Hf, Wf, 3)
    geom = jnp.moveaxis(geom_raw[:, 0], 2, 3).reshape(B, N, Df, Hf, Wf, 3)

    # bev_pool post-processing (matches PyTorch permute / transpose / cat(unbind))
    bev = bev[:, :, :V].reshape(B, OUT_CHANNELS, NZV, NXV, NYV)     # (B, C, Z, X, Y)
    out = jnp.swapaxes(bev, -2, -1)                                 # (B, C, Z, Y, X)
    final = out.transpose(0, 2, 1, 3, 4).reshape(B, NZV * OUT_CHANNELS, NYV, NXV)
    return final, geom


# ----------------------------------- pure-JAX refs -----------------------------------
def reference_geometry(frustum, c2l_rots, c2l_trans, intrins, post_rots, post_trans):
    hp = jax.lax.Precision.HIGHEST
    points = frustum[None, None] - post_trans[:, :, None, None, None, :]
    points = jnp.einsum("bnij,bndhwj->bndhwi", jnp.linalg.inv(post_rots), points,
                        precision=hp)
    points = jnp.concatenate([points[..., :2] * points[..., 2:3], points[..., 2:3]], axis=-1)
    combine = jnp.matmul(c2l_rots, jnp.linalg.inv(intrins), precision=hp)
    points = jnp.einsum("bnij,bndhwj->bndhwi", combine, points, precision=hp)
    return points + c2l_trans[:, :, None, None, None, :]


def reference_bev_pool(geom_flat, feats_flat, batch):
    g = jnp.stack([((geom_flat[:, i] - CVOX[i]) * INV_DX[i]).astype(jnp.int32)
                   for i in range(3)], -1)
    npts = geom_flat.shape[0]
    batch_ix = jnp.repeat(jnp.arange(batch, dtype=jnp.int32), npts // batch)
    kept = ((g[:, 0] >= 0) & (g[:, 0] < NXV) & (g[:, 1] >= 0) & (g[:, 1] < NYV)
            & (g[:, 2] >= 0) & (g[:, 2] < NZV))
    flat = batch_ix * V + (g[:, 2] * NXV + g[:, 0]) * NYV + g[:, 1]
    flat = jnp.where(kept, flat, batch * V)
    pooled = jnp.zeros((batch * V + 1, OUT_CHANNELS), jnp.float32).at[flat].add(feats_flat)
    pooled = pooled[:batch * V].reshape(batch, NZV, NXV, NYV, OUT_CHANNELS)
    out = jnp.swapaxes(pooled.transpose(0, 4, 1, 2, 3), -2, -1)
    return out.transpose(0, 2, 1, 3, 4).reshape(batch, NZV * OUT_CHANNELS, NYV, NXV)


# --------------------------------------- main ----------------------------------------
if __name__ == "__main__":
    key = jax.random.PRNGKey(0)
    ks = jax.random.split(key, 8)
    B, N = 2, 2

    imgs = jax.random.normal(ks[0], (B, N, IN_CHANNELS, Hi, Wi), dtype=jnp.float32)

    eye3 = jnp.eye(3, dtype=jnp.float32)
    fx_, fy_ = Wi / 2.0, Hi / 2.0
    cx_, cy_ = (Wi - 1) / 2.0, (Hi - 1) / 2.0
    intr3 = jnp.array([[fx_, 0.0, cx_], [0.0, fy_, cy_], [0.0, 0.0, 1.0]], jnp.float32)
    intr3 = intr3[None, None] + 0.01 * jax.random.normal(ks[1], (B, N, 3, 3), jnp.float32)
    aug3 = eye3[None, None] + 0.01 * jax.random.normal(ks[2], (B, N, 3, 3), jnp.float32)
    aug_t = 0.5 * jax.random.normal(ks[3], (B, N, 3), jnp.float32)
    c2l3 = eye3[None, None] + 0.05 * jax.random.normal(ks[4], (B, N, 3, 3), jnp.float32)
    c2l_t = jax.random.normal(ks[5], (B, N, 3), jnp.float32)

    def make44(rot, trans=None):
        m = jnp.zeros((B, N, 4, 4), jnp.float32).at[..., :3, :3].set(rot)
        if trans is not None:
            m = m.at[..., :3, 3].set(trans)
        return m.at[..., 3, 3].set(1.0)

    geometries = {
        "camera_intrinsics": make44(intr3),
        "img_aug_matrix": make44(aug3, aug_t),
        "camera2lidar": make44(c2l3, c2l_t),
    }

    # deterministic "conv" params for the get_cam_feats stand-in
    w_conv = 0.3 * jax.random.normal(ks[6], (IN_CHANNELS, OUT_CHANNELS), jnp.float32)
    b_conv = 0.1 * jax.random.normal(ks[7], (1, OUT_CHANNELS), jnp.float32)

    frustum = create_frustum()

    final, geom_k = jax.jit(base_transform_forward)(imgs, geometries, frustum, w_conv, b_conv)
    jax.block_until_ready(final)

    # ---- sanity checks against pure-JAX references ----
    geom_ref = reference_geometry(
        frustum,
        geometries["camera2lidar"][..., :3, :3], geometries["camera2lidar"][..., :3, 3],
        geometries["camera_intrinsics"][..., :3, :3],
        geometries["img_aug_matrix"][..., :3, :3], geometries["img_aug_matrix"][..., :3, 3])
    assert bool(jnp.allclose(geom_k, geom_ref, atol=1e-3, rtol=1e-3))

    # pure-JAX camera-feature reference for the end-to-end check
    pooled_ref = imgs.reshape(B, N, IN_CHANNELS, Hf, Hi // Hf, Wf, Wi // Wf).mean(axis=(4, 6))
    x_hw_ref = pooled_ref.transpose(0, 1, 3, 4, 2).reshape(B * N, HW, IN_CHANNELS)
    feat2d_ref = jnp.matmul(x_hw_ref, w_conv, precision=jax.lax.Precision.HIGHEST) + b_conv

    # end-to-end BEV check (uses the kernel's geometry so voxelization decisions match)
    geom_flat = geom_k.reshape(B * N * P, 3)
    feats_flat = jnp.broadcast_to(
        feat2d_ref[:, None], (B * N, Df, HW, OUT_CHANNELS)).reshape(B * N * P, OUT_CHANNELS)
    final_ref = reference_bev_pool(geom_flat, feats_flat, B)
    assert bool(jnp.allclose(final, final_ref, atol=2e-3, rtol=2e-3))

    assert final.shape == (B, NZV * OUT_CHANNELS, NYV, NXV)
    print("KERNEL_OK")
</pallas_src>

<mosaic_0001>
module attributes {stable_mosaic.version = 11 : i64} {
  func.func @_fused_lss_kernel(%arg0: i32, %arg1: i32, %arg2: memref<4x9xf32, #tpu.memory_space<smem>>, %arg3: memref<4x9xf32, #tpu.memory_space<smem>>, %arg4: memref<4x3xf32, #tpu.memory_space<smem>>, %arg5: memref<4x3xf32, #tpu.memory_space<smem>>, %arg6: memref<3x128xf32, #tpu.memory_space<vmem>>, %arg7: memref<1x4x64xf32, #tpu.memory_space<vmem>>, %arg8: memref<8x4xf32, #tpu.memory_space<vmem>>, %arg9: memref<8x1xf32, #tpu.memory_space<vmem>>, %arg10: memref<1x8x128xf32, #tpu.memory_space<vmem>>, %arg11: memref<1x1x2x3x128xf32, #tpu.memory_space<vmem>>) attributes {dimension_semantics = [#tpu.dimension_semantics<parallel>, #tpu.dimension_semantics<parallel>], iteration_bounds = array<i64: 2, 2>, scalar_prefetch = 0 : i64, scratch_operands = 0 : i64, tpu.core_type = #tpu.core_type<tc>, window_params = [{transform_indices = @transform_0, window_bounds = array<i64: 4, 9>}, {transform_indices = @transform_1, window_bounds = array<i64: 4, 9>}, {transform_indices = @transform_2, window_bounds = array<i64: 4, 3>}, {transform_indices = @transform_3, window_bounds = array<i64: 4, 3>}, {pipeline_mode = #tpu.pipeline_mode<synchronous>, transform_indices = @transform_4, window_bounds = array<i64: 3, 128>}, {transform_indices = @transform_5, window_bounds = array<i64: 1, 4, 64>}, {pipeline_mode = #tpu.pipeline_mode<synchronous>, transform_indices = @transform_6, window_bounds = array<i64: 8, 4>}, {pipeline_mode = #tpu.pipeline_mode<synchronous>, transform_indices = @transform_7, window_bounds = array<i64: 8, 1>}, {transform_indices = @transform_8, window_bounds = array<i64: 1, 8, 128>}, {transform_indices = @transform_9, window_bounds = array<i64: 1, 1, 2, 3, 128>}]} {
    %c128_i32 = arith.constant 128 : i32
    %0 = arith.muli %arg1, %c128_i32 : i32
    %c0 = arith.constant 0 : index
    %c0_0 = arith.constant 0 : index
    %1 = vector.load %arg6[%c0, %c0_0] : memref<3x128xf32, #tpu.memory_space<vmem>>, vector<1x128xf32>
    %c1 = arith.constant 1 : index
    %c0_1 = arith.constant 0 : index
    %2 = vector.load %arg6[%c1, %c0_1] : memref<3x128xf32, #tpu.memory_space<vmem>>, vector<1x128xf32>
    %c2 = arith.constant 2 : index
    %c0_2 = arith.constant 0 : index
    %3 = vector.load %arg6[%c2, %c0_2] : memref<3x128xf32, #tpu.memory_space<vmem>>, vector<1x128xf32>
    %4 = tpu.iota {dimensions = array<i32: 0>} : vector<128x128xi32>
    %5 = vector.broadcast %0 : i32 to vector<128x128xi32>
    %6 = arith.addi %4, %5 : vector<128x128xi32>
    %c0_3 = arith.constant 0 : index
    %c0_4 = arith.constant 0 : index
    %c0_5 = arith.constant 0 : index
    %7 = vector.load %arg7[%c0_3, %c0_4, %c0_5] : memref<1x4x64xf32, #tpu.memory_space<vmem>>, vector<1x4x64xf32>
    %8 = vector.shape_cast %7 : vector<1x4x64xf32> to vector<4x64xf32>
    %c0_6 = arith.constant 0 : index
    %c0_7 = arith.constant 0 : index
    %9 = vector.load %arg9[%c0_6, %c0_7] : memref<8x1xf32, #tpu.memory_space<vmem>>, vector<8x1xf32>
    %c0_8 = arith.constant 0 : index
    %c0_9 = arith.constant 0 : index
    %10 = vector.load %arg8[%c0_8, %c0_9] : memref<8x4xf32, #tpu.memory_space<vmem>>, vector<8x1xf32>
    %11 = vector.extract_strided_slice %8 {offsets = [0, 0], sizes = [1, 64], strides = [1, 1]} : vector<4x64xf32> to vector<1x64xf32>
    %12 = vector.broadcast %10 : vector<8x1xf32> to vector<8x64xf32>
    %13 = vector.broadcast %11 : vector<1x64xf32> to vector<8x64xf32>
    %14 = arith.mulf %12, %13 : vector<8x64xf32>
    %15 = vector.broadcast %9 : vector<8x1xf32> to vector<8x64xf32>
    %16 = arith.addf %15, %14 : vector<8x64xf32>
    %c0_10 = arith.constant 0 : index
    %c1_11 = arith.constant 1 : index
    %17 = vector.load %arg8[%c0_10, %c1_11] : memref<8x4xf32, #tpu.memory_space<vmem>>, vector<8x1xf32>
    %18 = vector.extract_strided_slice %8 {offsets = [1, 0], sizes = [1, 64], strides = [1, 1]} : vector<4x64xf32> to vector<1x64xf32>
    %19 = vector.broadcast %17 : vector<8x1xf32> to vector<8x64xf32>
    %20 = vector.broadcast %18 : vector<1x64xf32> to vector<8x64xf32>
    %21 = arith.mulf %19, %20 : vector<8x64xf32>
    %22 = arith.addf %16, %21 : vector<8x64xf32>
    %c0_12 = arith.constant 0 : index
    %c2_13 = arith.constant 2 : index
    %23 = vector.load %arg8[%c0_12, %c2_13] : memref<8x4xf32, #tpu.memory_space<vmem>>, vector<8x1xf32>
    %24 = vector.extract_strided_slice %8 {offsets = [2, 0], sizes = [1, 64], strides = [1, 1]} : vector<4x64xf32> to vector<1x64xf32>
    %25 = vector.broadcast %23 : vector<8x1xf32> to vector<8x64xf32>
    %26 = vector.broadcast %24 : vector<1x64xf32> to vector<8x64xf32>
    %27 = arith.mulf %25, %26 : vector<8x64xf32>
    %28 = arith.addf %22, %27 : vector<8x64xf32>
    %c0_14 = arith.constant 0 : index
    %c3 = arith.constant 3 : index
    %29 = vector.load %arg8[%c0_14, %c3] : memref<8x4xf32, #tpu.memory_space<vmem>>, vector<8x1xf32>
    %30 = vector.extract_strided_slice %8 {offsets = [3, 0], sizes = [1, 64], strides = [1, 1]} : vector<4x64xf32> to vector<1x64xf32>
    %31 = vector.broadcast %29 : vector<8x1xf32> to vector<8x64xf32>
    %32 = vector.broadcast %30 : vector<1x64xf32> to vector<8x64xf32>
    %33 = arith.mulf %31, %32 : vector<8x64xf32>
    %34 = arith.addf %28, %33 : vector<8x64xf32>
    %c2_i32 = arith.constant 2 : i32
    %35 = arith.muli %arg0, %c2_i32 : i32
    %c0_i32 = arith.constant 0 : i32
    %36 = arith.addi %35, %c0_i32 : i32
    %37 = arith.index_cast %36 : i32 to index
    %c0_15 = arith.constant 0 : index
    %38 = memref.load %arg4[%37, %c0_15] : memref<4x3xf32, #tpu.memory_space<smem>>
    %39 = vector.broadcast %38 : f32 to vector<1x128xf32>
    %40 = arith.subf %1, %39 : vector<1x128xf32>
    %41 = arith.index_cast %36 : i32 to index
    %c1_16 = arith.constant 1 : index
    %42 = memref.load %arg4[%41, %c1_16] : memref<4x3xf32, #tpu.memory_space<smem>>
    %43 = vector.broadcast %42 : f32 to vector<1x128xf32>
    %44 = arith.subf %2, %43 : vector<1x128xf32>
    %45 = arith.index_cast %36 : i32 to index
    %c2_17 = arith.constant 2 : index
    %46 = memref.load %arg4[%45, %c2_17] : memref<4x3xf32, #tpu.memory_space<smem>>
    %47 = vector.broadcast %46 : f32 to vector<1x128xf32>
    %48 = arith.subf %3, %47 : vector<1x128xf32>
    %49 = arith.index_cast %36 : i32 to index
    %c0_18 = arith.constant 0 : index
    %50 = memref.load %arg2[%49, %c0_18] : memref<4x9xf32, #tpu.memory_space<smem>>
    %51 = vector.broadcast %50 : f32 to vector<1x128xf32>
    %52 = arith.mulf %51, %40 : vector<1x128xf32>
    %53 = arith.index_cast %36 : i32 to index
    %c1_19 = arith.constant 1 : index
    %54 = memref.load %arg2[%53, %c1_19] : memref<4x9xf32, #tpu.memory_space<smem>>
    %55 = vector.broadcast %54 : f32 to vector<1x128xf32>
    %56 = arith.mulf %55, %44 : vector<1x128xf32>
    %57 = arith.addf %52, %56 : vector<1x128xf32>
    %58 = arith.index_cast %36 : i32 to index
    %c2_20 = arith.constant 2 : index
    %59 = memref.load %arg2[%58, %c2_20] : memref<4x9xf32, #tpu.memory_space<smem>>
    %60 = vector.broadcast %59 : f32 to vector<1x128xf32>
    %61 = arith.mulf %60, %48 : vector<1x128xf32>
    %62 = arith.addf %57, %61 : vector<1x128xf32>
    %63 = arith.index_cast %36 : i32 to index
    %c3_21 = arith.constant 3 : index
    %64 = memref.load %arg2[%63, %c3_21] : memref<4x9xf32, #tpu.memory_space<smem>>
    %65 = vector.broadcast %64 : f32 to vector<1x128xf32>
    %66 = arith.mulf %65, %40 : vector<1x128xf32>
    %67 = arith.index_cast %36 : i32 to index
    %c4 = arith.constant 4 : index
    %68 = memref.load %arg2[%67, %c4] : memref<4x9xf32, #tpu.memory_space<smem>>
    %69 = vector.broadcast %68 : f32 to vector<1x128xf32>
    %70 = arith.mulf %69, %44 : vector<1x128xf32>
    %71 = arith.addf %66, %70 : vector<1x128xf32>
    %72 = arith.index_cast %36 : i32 to index
    %c5 = arith.constant 5 : index
    %73 = memref.load %arg2[%72, %c5] : memref<4x9xf32, #tpu.memory_space<smem>>
    %74 = vector.broadcast %73 : f32 to vector<1x128xf32>
    %75 = arith.mulf %74, %48 : vector<1x128xf32>
    %76 = arith.addf %71, %75 : vector<1x128xf32>
    %77 = arith.index_cast %36 : i32 to index
    %c6 = arith.constant 6 : index
    %78 = memref.load %arg2[%77, %c6] : memref<4x9xf32, #tpu.memory_space<smem>>
    %79 = vector.broadcast %78 : f32 to vector<1x128xf32>
    %80 = arith.mulf %79, %40 : vector<1x128xf32>
    %81 = arith.index_cast %36 : i32 to index
    %c7 = arith.constant 7 : index
    %82 = memref.load %arg2[%81, %c7] : memref<4x9xf32, #tpu.memory_space<smem>>
    %83 = vector.broadcast %82 : f32 to vector<1x128xf32>
    %84 = arith.mulf %83, %44 : vector<1x128xf32>
    %85 = arith.addf %80, %84 : vector<1x128xf32>
    %86 = arith.index_cast %36 : i32 to index
    %c8 = arith.constant 8 : index
    %87 = memref.load %arg2[%86, %c8] : memref<4x9xf32, #tpu.memory_space<smem>>
    %88 = vector.broadcast %87 : f32 to vector<1x128xf32>
    %89 = arith.mulf %88, %48 : vector<1x128xf32>
    %90 = arith.addf %85, %89 : vector<1x128xf32>
    %91 = arith.mulf %62, %90 : vector<1x128xf32>
    %92 = arith.mulf %76, %90 : vector<1x128xf32>
    %93 = arith.index_cast %36 : i32 to index
    %c0_22 = arith.constant 0 : index
    %94 = memref.load %arg3[%93, %c0_22] : memref<4x9xf32, #tpu.memory_space<smem>>
    %95 = vector.broadcast %94 : f32 to vector<1x128xf32>
    %96 = arith.mulf %95, %91 : vector<1x128xf32>
    %97 = arith.index_cast %36 : i32 to index
    %c1_23 = arith.constant 1 : index
    %98 = memref.load %arg3[%97, %c1_23] : memref<4x9xf32, #tpu.memory_space<smem>>
    %99 = vector.broadcast %98 : f32 to vector<1x128xf32>
    %100 = arith.mulf %99, %92 : vector<1x128xf32>
    %101 = arith.addf %96, %100 : vector<1x128xf32>
    %102 = arith.index_cast %36 : i32 to index
    %c2_24 = arith.constant 2 : index
    %103 = memref.load %arg3[%102, %c2_24] : memref<4x9xf32, #tpu.memory_space<smem>>
    %104 = vector.broadcast %103 : f32 to vector<1x128xf32>
    %105 = arith.mulf %104, %90 : vector<1x128xf32>
    %106 = arith.addf %101, %105 : vector<1x128xf32>
    %107 = arith.index_cast %36 : i32 to index
    %c0_25 = arith.constant 0 : index
    %108 = memref.load %arg5[%107, %c0_25] : memref<4x3xf32, #tpu.memory_space<smem>>
    %109 = vector.broadcast %108 : f32 to vector<1x128xf32>
    %110 = arith.addf %106, %109 : vector<1x128xf32>
    %111 = arith.index_cast %36 : i32 to index
    %c3_26 = arith.constant 3 : index
    %112 = memref.load %arg3[%111, %c3_26] : memref<4x9xf32, #tpu.memory_space<smem>>
    %113 = vector.broadcast %112 : f32 to vector<1x128xf32>
    %114 = arith.mulf %113, %91 : vector<1x128xf32>
    %115 = arith.index_cast %36 : i32 to index
    %c4_27 = arith.constant 4 : index
    %116 = memref.load %arg3[%115, %c4_27] : memref<4x9xf32, #tpu.memory_space<smem>>
    %117 = vector.broadcast %116 : f32 to vector<1x128xf32>
    %118 = arith.mulf %117, %92 : vector<1x128xf32>
    %119 = arith.addf %114, %118 : vector<1x128xf32>
    %120 = arith.index_cast %36 : i32 to index
    %c5_28 = arith.constant 5 : index
    %121 = memref.load %arg3[%120, %c5_28] : memref<4x9xf32, #tpu.memory_space<smem>>
    %122 = vector.broadcast %121 : f32 to vector<1x128xf32>
    %123 = arith.mulf %122, %90 : vector<1x128xf32>
    %124 = arith.addf %119, %123 : vector<1x128xf32>
    %125 = arith.index_cast %36 : i32 to index
    %c1_29 = arith.constant 1 : index
    %126 = memref.load %arg5[%125, %c1_29] : memref<4x3xf32, #tpu.memory_space<smem>>
    %127 = vector.broadcast %126 : f32 to vector<1x128xf32>
    %128 = arith.addf %124, %127 : vector<1x128xf32>
    %129 = arith.index_cast %36 : i32 to index
    %c6_30 = arith.constant 6 : index
    %130 = memref.load %arg3[%129, %c6_30] : memref<4x9xf32, #tpu.memory_space<smem>>
    %131 = vector.broadcast %130 : f32 to vector<1x128xf32>
    %132 = arith.mulf %131, %91 : vector<1x128xf32>
    %133 = arith.index_cast %36 : i32 to index
    %c7_31 = arith.constant 7 : index
    %134 = memref.load %arg3[%133, %c7_31] : memref<4x9xf32, #tpu.memory_space<smem>>
    %135 = vector.broadcast %134 : f32 to vector<1x128xf32>
    %136 = arith.mulf %135, %92 : vector<1x128xf32>
    %137 = arith.addf %132, %136 : vector<1x128xf32>
    %138 = arith.index_cast %36 : i32 to index
    %c8_32 = arith.constant 8 : index
    %139 = memref.load %arg3[%138, %c8_32] : memref<4x9xf32, #tpu.memory_space<smem>>
    %140 = vector.broadcast %139 : f32 to vector<1x128xf32>
    %141 = arith.mulf %140, %90 : vector<1x128xf32>
    %142 = arith.addf %137, %141 : vector<1x128xf32>
    %143 = arith.index_cast %36 : i32 to index
    %c2_33 = arith.constant 2 : index
    %144 = memref.load %arg5[%143, %c2_33] : memref<4x3xf32, #tpu.memory_space<smem>>
    %145 = vector.broadcast %144 : f32 to vector<1x128xf32>
    %146 = arith.addf %142, %145 : vector<1x128xf32>
    %147 = tpu.concatenate %110, %128, %146 in 0 : vector<1x128xf32>, vector<1x128xf32>, vector<1x128xf32> -> vector<3x128xf32>
    %c0_34 = arith.constant 0 : index
    %c0_35 = arith.constant 0 : index
    %c0_36 = arith.constant 0 : index
    %c0_37 = arith.constant 0 : index
    %c0_38 = arith.constant 0 : index
    %148 = vector.load %arg11[%c0_34, %c0_35, %c0_36, %c0_37, %c0_38] : memref<1x1x2x3x128xf32, #tpu.memory_space<vmem>>, vector<1x1x1x3x128xf32>
    %149 = vector.shape_cast %148 : vector<1x1x1x3x128xf32> to vector<3x128xf32>
    %150 = vector.shape_cast %147 : vector<3x128xf32> to vector<1x1x1x3x128xf32>
    tpu.vector_store %arg11[%c0_34, %c0_35, %c0_36, %c0_37, %c0_38], %150 {strides = array<i32>} : memref<1x1x2x3x128xf32, #tpu.memory_space<vmem>>, vector<1x1x1x3x128xf32>,
    %cst = arith.constant -8.000000e+00 : f32
    %151 = vector.broadcast %cst : f32 to vector<1x128xf32>
    %152 = arith.subf %110, %151 : vector<1x128xf32>
    %cst_39 = arith.constant 1.000000e+00 : f32
    %153 = vector.broadcast %cst_39 : f32 to vector<1x128xf32>
    %154 = arith.mulf %152, %153 : vector<1x128xf32>
    %155 = arith.fptosi %154 : vector<1x128xf32> to vector<1x128xi32>
    %cst_40 = arith.constant -8.000000e+00 : f32
    %156 = vector.broadcast %cst_40 : f32 to vector<1x128xf32>
    %157 = arith.subf %128, %156 : vector<1x128xf32>
    %cst_41 = arith.constant 1.000000e+00 : f32
    %158 = vector.broadcast %cst_41 : f32 to vector<1x128xf32>
    %159 = arith.mulf %157, %158 : vector<1x128xf32>
    %160 = arith.fptosi %159 : vector<1x128xf32> to vector<1x128xi32>
    %cst_42 = arith.constant -2.000000e+01 : f32
    %161 = vector.broadcast %cst_42 : f32 to vector<1x128xf32>
    %162 = arith.subf %146, %161 : vector<1x128xf32>
    %cst_43 = arith.constant 2.500000e-02 : f32
    %163 = vector.broadcast %cst_43 : f32 to vector<1x128xf32>
    %164 = arith.mulf %162, %163 : vector<1x128xf32>
    %165 = arith.fptosi %164 : vector<1x128xf32> to vector<1x128xi32>
    %c0_i32_44 = arith.constant 0 : i32
    %166 = vector.broadcast %c0_i32_44 : i32 to vector<1x128xi32>
    %167 = arith.cmpi sge, %155, %166 : vector<1x128xi32>
    %c16_i32 = arith.constant 16 : i32
    %168 = vector.broadcast %c16_i32 : i32 to vector<1x128xi32>
    %169 = arith.cmpi slt, %155, %168 : vector<1x128xi32>
    %170 = arith.andi %167, %169 : vector<1x128xi1>
    %c0_i32_45 = arith.constant 0 : i32
    %171 = vector.broadcast %c0_i32_45 : i32 to vector<1x128xi32>
    %172 = arith.cmpi sge, %160, %171 : vector<1x128xi32>
    %173 = arith.andi %170, %172 : vector<1x128xi1>
    %c16_i32_46 = arith.constant 16 : i32
    %174 = vector.broadcast %c16_i32_46 : i32 to vector<1x128xi32>
    %175 = arith.cmpi slt, %160, %174 : vector<1x128xi32>
    %176 = arith.andi %173, %175 : vector<1x128xi1>
    %c0_i32_47 = arith.constant 0 : i32
    %177 = vector.broadcast %c0_i32_47 : i32 to vector<1x128xi32>
    %178 = arith.cmpi sge, %165, %177 : vector<1x128xi32>
    %179 = arith.andi %176, %178 : vector<1x128xi1>
    %c1_i32 = arith.constant 1 : i32
    %180 = vector.broadcast %c1_i32 : i32 to vector<1x128xi32>
    %181 = arith.cmpi slt, %165, %180 : vector<1x128xi32>
    %182 = arith.andi %179, %181 : vector<1x128xi1>
    %c16_i32_48 = arith.constant 16 : i32
    %183 = vector.broadcast %c16_i32_48 : i32 to vector<1x128xi32>
    %184 = arith.muli %165, %183 : vector<1x128xi32>
    %185 = arith.addi %184, %155 : vector<1x128xi32>
    %c16_i32_49 = arith.constant 16 : i32
    %186 = vector.broadcast %c16_i32_49 : i32 to vector<1x128xi32>
    %187 = arith.muli %185, %186 : vector<1x128xi32>
    %188 = arith.addi %187, %160 : vector<1x128xi32>
    %c-1_i32 = arith.constant -1 : i32
    %189 = vector.broadcast %c-1_i32 : i32 to vector<1x128xi32>
    %190 = arith.select %182, %188, %189 : vector<1x128xi1>, vector<1x128xi32>
    %191 = vector.broadcast %190 : vector<1x128xi32> to vector<128x128xi32>
    %192 = arith.cmpi eq, %191, %6 : vector<128x128xi32>
    %193 = arith.extui %192 : vector<128x128xi1> to vector<128x128xi32>
    %194 = arith.sitofp %193 : vector<128x128xi32> to vector<128x128xf32>
    %195 = vector.extract_strided_slice %34 {offsets = [0, 0], sizes = [8, 32], strides = [1, 1]} : vector<8x64xf32> to vector<8x32xf32>
    %196 = tpu.concatenate %195, %195, %195, %195 in 1 : vector<8x32xf32>, vector<8x32xf32>, vector<8x32xf32>, vector<8x32xf32> -> vector<8x128xf32>
    %c2_i32_50 = arith.constant 2 : i32
    %197 = arith.muli %arg0, %c2_i32_50 : i32
    %c1_i32_51 = arith.constant 1 : i32
    %198 = arith.addi %197, %c1_i32_51 : i32
    %199 = arith.index_cast %198 : i32 to index
    %c0_52 = arith.constant 0 : index
    %200 = memref.load %arg4[%199, %c0_52] : memref<4x3xf32, #tpu.memory_space<smem>>
    %201 = vector.broadcast %200 : f32 to vector<1x128xf32>
    %202 = arith.subf %1, %201 : vector<1x128xf32>
    %203 = arith.index_cast %198 : i32 to index
    %c1_53 = arith.constant 1 : index
    %204 = memref.load %arg4[%203, %c1_53] : memref<4x3xf32, #tpu.memory_space<smem>>
    %205 = vector.broadcast %204 : f32 to vector<1x128xf32>
    %206 = arith.subf %2, %205 : vector<1x128xf32>
    %207 = arith.index_cast %198 : i32 to index
    %c2_54 = arith.constant 2 : index
    %208 = memref.load %arg4[%207, %c2_54] : memref<4x3xf32, #tpu.memory_space<smem>>
    %209 = vector.broadcast %208 : f32 to vector<1x128xf32>
    %210 = arith.subf %3, %209 : vector<1x128xf32>
    %211 = arith.index_cast %198 : i32 to index
    %c0_55 = arith.constant 0 : index
    %212 = memref.load %arg2[%211, %c0_55] : memref<4x9xf32, #tpu.memory_space<smem>>
    %213 = vector.broadcast %212 : f32 to vector<1x128xf32>
    %214 = arith.mulf %213, %202 : vector<1x128xf32>
    %215 = arith.index_cast %198 : i32 to index
    %c1_56 = arith.constant 1 : index
    %216 = memref.load %arg2[%215, %c1_56] : memref<4x9xf32, #tpu.memory_space<smem>>
    %217 = vector.broadcast %216 : f32 to vector<1x128xf32>
    %218 = arith.mulf %217, %206 : vector<1x128xf32>
    %219 = arith.addf %214, %218 : vector<1x128xf32>
    %220 = arith.index_cast %198 : i32 to index
    %c2_57 = arith.constant 2 : index
    %221 = memref.load %arg2[%220, %c2_57] : memref<4x9xf32, #tpu.memory_space<smem>>
    %222 = vector.broadcast %221 : f32 to vector<1x128xf32>
    %223 = arith.mulf %222, %210 : vector<1x128xf32>
    %224 = arith.addf %219, %223 : vector<1x128xf32>
    %225 = arith.index_cast %198 : i32 to index
    %c3_58 = arith.constant 3 : index
    %226 = memref.load %arg2[%225, %c3_58] : memref<4x9xf32, #tpu.memory_space<smem>>
    %227 = vector.broadcast %226 : f32 to vector<1x128xf32>
    %228 = arith.mulf %227, %202 : vector<1x128xf32>
    %229 = arith.index_cast %198 : i32 to index
    %c4_59 = arith.constant 4 : index
    %230 = memref.load %arg2[%229, %c4_59] : memref<4x9xf32, #tpu.memory_space<smem>>
    %231 = vector.broadcast %230 : f32 to vector<1x128xf32>
    %232 = arith.mulf %231, %206 : vector<1x128xf32>
    %233 = arith.addf %228, %232 : vector<1x128xf32>
    %234 = arith.index_cast %198 : i32 to index
    %c5_60 = arith.constant 5 : index
    %235 = memref.load %arg2[%234, %c5_60] : memref<4x9xf32, #tpu.memory_space<smem>>
    %236 = vector.broadcast %235 : f32 to vector<1x128xf32>
    %237 = arith.mulf %236, %210 : vector<1x128xf32>
    %238 = arith.addf %233, %237 : vector<1x128xf32>
    %239 = arith.index_cast %198 : i32 to index
    %c6_61 = arith.constant 6 : index
    %240 = memref.load %arg2[%239, %c6_61] : memref<4x9xf32, #tpu.memory_space<smem>>
    %241 = vector.broadcast %240 : f32 to vector<1x128xf32>
    %242 = arith.mulf %241, %202 : vector<1x128xf32>
    %243 = arith.index_cast %198 : i32 to index
    %c7_62 = arith.constant 7 : index
    %244 = memref.load %arg2[%243, %c7_62] : memref<4x9xf32, #tpu.memory_space<smem>>
    %245 = vector.broadcast %244 : f32 to vector<1x128xf32>
    %246 = arith.mulf %245, %206 : vector<1x128xf32>
    %247 = arith.addf %242, %246 : vector<1x128xf32>
    %248 = arith.index_cast %198 : i32 to index
    %c8_63 = arith.constant 8 : index
    %249 = memref.load %arg2[%248, %c8_63] : memref<4x9xf32, #tpu.memory_space<smem>>
    %250 = vector.broadcast %249 : f32 to vector<1x128xf32>
    %251 = arith.mulf %250, %210 : vector<1x128xf32>
    %252 = arith.addf %247, %251 : vector<1x128xf32>
    %253 = arith.mulf %224, %252 : vector<1x128xf32>
    %254 = arith.mulf %238, %252 : vector<1x128xf32>
    %255 = arith.index_cast %198 : i32 to index
    %c0_64 = arith.constant 0 : index
    %256 = memref.load %arg3[%255, %c0_64] : memref<4x9xf32, #tpu.memory_space<smem>>
    %257 = vector.broadcast %256 : f32 to vector<1x128xf32>
    %258 = arith.mulf %257, %253 : vector<1x128xf32>
    %259 = arith.index_cast %198 : i32 to index
    %c1_65 = arith.constant 1 : index
    %260 = memref.load %arg3[%259, %c1_65] : memref<4x9xf32, #tpu.memory_space<smem>>
    %261 = vector.broadcast %260 : f32 to vector<1x128xf32>
    %262 = arith.mulf %261, %254 : vector<1x128xf32>
    %263 = arith.addf %258, %262 : vector<1x128xf32>
    %264 = arith.index_cast %198 : i32 to index
    %c2_66 = arith.constant 2 : index
    %265 = memref.load %arg3[%264, %c2_66] : memref<4x9xf32, #tpu.memory_space<smem>>
    %266 = vector.broadcast %265 : f32 to vector<1x128xf32>
    %267 = arith.mulf %266, %252 : vector<1x128xf32>
    %268 = arith.addf %263, %267 : vector<1x128xf32>
    %269 = arith.index_cast %198 : i32 to index
    %c0_67 = arith.constant 0 : index
    %270 = memref.load %arg5[%269, %c0_67] : memref<4x3xf32, #tpu.memory_space<smem>>
    %271 = vector.broadcast %270 : f32 to vector<1x128xf32>
    %272 = arith.addf %268, %271 : vector<1x128xf32>
    %273 = arith.index_cast %198 : i32 to index
    %c3_68 = arith.constant 3 : index
    %274 = memref.load %arg3[%273, %c3_68] : memref<4x9xf32, #tpu.memory_space<smem>>
    %275 = vector.broadcast %274 : f32 to vector<1x128xf32>
    %276 = arith.mulf %275, %253 : vector<1x128xf32>
    %277 = arith.index_cast %198 : i32 to index
    %c4_69 = arith.constant 4 : index
    %278 = memref.load %arg3[%277, %c4_69] : memref<4x9xf32, #tpu.memory_space<smem>>
    %279 = vector.broadcast %278 : f32 to vector<1x128xf32>
    %280 = arith.mulf %279, %254 : vector<1x128xf32>
    %281 = arith.addf %276, %280 : vector<1x128xf32>
    %282 = arith.index_cast %198 : i32 to index
    %c5_70 = arith.constant 5 : index
    %283 = memref.load %arg3[%282, %c5_70] : memref<4x9xf32, #tpu.memory_space<smem>>
    %284 = vector.broadcast %283 : f32 to vector<1x128xf32>
    %285 = arith.mulf %284, %252 : vector<1x128xf32>
    %286 = arith.addf %281, %285 : vector<1x128xf32>
    %287 = arith.index_cast %198 : i32 to index
    %c1_71 = arith.constant 1 : index
    %288 = memref.load %arg5[%287, %c1_71] : memref<4x3xf32, #tpu.memory_space<smem>>
    %289 = vector.broadcast %288 : f32 to vector<1x128xf32>
    %290 = arith.addf %286, %289 : vector<1x128xf32>
    %291 = arith.index_cast %198 : i32 to index
    %c6_72 = arith.constant 6 : index
    %292 = memref.load %arg3[%291, %c6_72] : memref<4x9xf32, #tpu.memory_space<smem>>
    %293 = vector.broadcast %292 : f32 to vector<1x128xf32>
    %294 = arith.mulf %293, %253 : vector<1x128xf32>
    %295 = arith.index_cast %198 : i32 to index
    %c7_73 = arith.constant 7 : index
    %296 = memref.load %arg3[%295, %c7_73] : memref<4x9xf32, #tpu.memory_space<smem>>
    %297 = vector.broadcast %296 : f32 to vector<1x128xf32>
    %298 = arith.mulf %297, %254 : vector<1x128xf32>
    %299 = arith.addf %294, %298 : vector<1x128xf32>
    %300 = arith.index_cast %198 : i32 to index
    %c8_74 = arith.constant 8 : index
    %301 = memref.load %arg3[%300, %c8_74] : memref<4x9xf32, #tpu.memory_space<smem>>
    %302 = vector.broadcast %301 : f32 to vector<1x128xf32>
    %303 = arith.mulf %302, %252 : vector<1x128xf32>
    %304 = arith.addf %299, %303 : vector<1x128xf32>
    %305 = arith.index_cast %198 : i32 to index
    %c2_75 = arith.constant 2 : index
    %306 = memref.load %arg5[%305, %c2_75] : memref<4x3xf32, #tpu.memory_space<smem>>
    %307 = vector.broadcast %306 : f32 to vector<1x128xf32>
    %308 = arith.addf %304, %307 : vector<1x128xf32>
    %309 = tpu.concatenate %272, %290, %308 in 0 : vector<1x128xf32>, vector<1x128xf32>, vector<1x128xf32> -> vector<3x128xf32>
    %c0_76 = arith.constant 0 : index
    %c0_77 = arith.constant 0 : index
    %c1_78 = arith.constant 1 : index
    %c0_79 = arith.constant 0 : index
    %c0_80 = arith.constant 0 : index
    %310 = vector.load %arg11[%c0_76, %c0_77, %c1_78, %c0_79, %c0_80] : memref<1x1x2x3x128xf32, #tpu.memory_space<vmem>>, vector<1x1x1x3x128xf32>
    %311 = vector.shape_cast %310 : vector<1x1x1x3x128xf32> to vector<3x128xf32>
    %312 = vector.shape_cast %309 : vector<3x128xf32> to vector<1x1x1x3x128xf32>
    tpu.vector_store %arg11[%c0_76, %c0_77, %c1_78, %c0_79, %c0_80], %312 {strides = array<i32>} : memref<1x1x2x3x128xf32, #tpu.memory_space<vmem>>, vector<1x1x1x3x128xf32>,
    %cst_81 = arith.constant -8.000000e+00 : f32
    %313 = vector.broadcast %cst_81 : f32 to vector<1x128xf32>
    %314 = arith.subf %272, %313 : vector<1x128xf32>
    %cst_82 = arith.constant 1.000000e+00 : f32
    %315 = vector.broadcast %cst_82 : f32 to vector<1x128xf32>
    %316 = arith.mulf %314, %315 : vector<1x128xf32>
    %317 = arith.fptosi %316 : vector<1x128xf32> to vector<1x128xi32>
    %cst_83 = arith.constant -8.000000e+00 : f32
    %318 = vector.broadcast %cst_83 : f32 to vector<1x128xf32>
    %319 = arith.subf %290, %318 : vector<1x128xf32>
    %cst_84 = arith.constant 1.000000e+00 : f32
    %320 = vector.broadcast %cst_84 : f32 to vector<1x128xf32>
    %321 = arith.mulf %319, %320 : vector<1x128xf32>
    %322 = arith.fptosi %321 : vector<1x128xf32> to vector<1x128xi32>
    %cst_85 = arith.constant -2.000000e+01 : f32
    %323 = vector.broadcast %cst_85 : f32 to vector<1x128xf32>
    %324 = arith.subf %308, %323 : vector<1x128xf32>
    %cst_86 = arith.constant 2.500000e-02 : f32
    %325 = vector.broadcast %cst_86 : f32 to vector<1x128xf32>
    %326 = arith.mulf %324, %325 : vector<1x128xf32>
    %327 = arith.fptosi %326 : vector<1x128xf32> to vector<1x128xi32>
    %c0_i32_87 = arith.constant 0 : i32
    %328 = vector.broadcast %c0_i32_87 : i32 to vector<1x128xi32>
    %329 = arith.cmpi sge, %317, %328 : vector<1x128xi32>
    %c16_i32_88 = arith.constant 16 : i32
    %330 = vector.broadcast %c16_i32_88 : i32 to vector<1x128xi32>
    %331 = arith.cmpi slt, %317, %330 : vector<1x128xi32>
    %332 = arith.andi %329, %331 : vector<1x128xi1>
    %c0_i32_89 = arith.constant 0 : i32
    %333 = vector.broadcast %c0_i32_89 : i32 to vector<1x128xi32>
    %334 = arith.cmpi sge, %322, %333 : vector<1x128xi32>
    %335 = arith.andi %332, %334 : vector<1x128xi1>
    %c16_i32_90 = arith.constant 16 : i32
    %336 = vector.broadcast %c16_i32_90 : i32 to vector<1x128xi32>
    %337 = arith.cmpi slt, %322, %336 : vector<1x128xi32>
    %338 = arith.andi %335, %337 : vector<1x128xi1>
    %c0_i32_91 = arith.constant 0 : i32
    %339 = vector.broadcast %c0_i32_91 : i32 to vector<1x128xi32>
    %340 = arith.cmpi sge, %327, %339 : vector<1x128xi32>
    %341 = arith.andi %338, %340 : vector<1x128xi1>
    %c1_i32_92 = arith.constant 1 : i32
    %342 = vector.broadcast %c1_i32_92 : i32 to vector<1x128xi32>
    %343 = arith.cmpi slt, %327, %342 : vector<1x128xi32>
    %344 = arith.andi %341, %343 : vector<1x128xi1>
    %c16_i32_93 = arith.constant 16 : i32
    %345 = vector.broadcast %c16_i32_93 : i32 to vector<1x128xi32>
    %346 = arith.muli %327, %345 : vector<1x128xi32>
    %347 = arith.addi %346, %317 : vector<1x128xi32>
    %c16_i32_94 = arith.constant 16 : i32
    %348 = vector.broadcast %c16_i32_94 : i32 to vector<1x128xi32>
    %349 = arith.muli %347, %348 : vector<1x128xi32>
    %350 = arith.addi %349, %322 : vector<1x128xi32>
    %c-1_i32_95 = arith.constant -1 : i32
    %351 = vector.broadcast %c-1_i32_95 : i32 to vector<1x128xi32>
    %352 = arith.select %344, %350, %351 : vector<1x128xi1>, vector<1x128xi32>
    %353 = vector.broadcast %352 : vector<1x128xi32> to vector<128x128xi32>
    %354 = arith.cmpi eq, %353, %6 : vector<128x128xi32>
    %355 = arith.extui %354 : vector<128x128xi1> to vector<128x128xi32>
    %356 = arith.sitofp %355 : vector<128x128xi32> to vector<128x128xf32>
    %357 = vector.extract_strided_slice %34 {offsets = [0, 32], sizes = [8, 32], strides = [1, 1]} : vector<8x64xf32> to vector<8x32xf32>
    %358 = tpu.concatenate %357, %357, %357, %357 in 1 : vector<8x32xf32>, vector<8x32xf32>, vector<8x32xf32>, vector<8x32xf32> -> vector<8x128xf32>
    %359 = tpu.concatenate %194, %356 in 1 : vector<128x128xf32>, vector<128x128xf32> -> vector<128x256xf32>
    %360 = tpu.concatenate %196, %358 in 1 : vector<8x128xf32>, vector<8x128xf32> -> vector<8x256xf32>
    %361 = tpu.transpose %359, [1, 0] : vector<128x256xf32> -> vector<256x128xf32>
    %cst_96 = arith.constant dense<0.000000e+00> : vector<8x128xf32>
    %362 = tpu.matmul %360, %361, %cst_96 {dimension_numbers = #tpu.dot_dimension_numbers<[1], [0], [0], [1], [0, 0, 1, 1], [], []>} : vector<8x256xf32>, vector<256x128xf32>, vector<8x128xf32> -> vector<8x128xf32>
    %c0_97 = arith.constant 0 : index
    %c0_98 = arith.constant 0 : index
    %c0_99 = arith.constant 0 : index
    %363 = vector.load %arg10[%c0_97, %c0_98, %c0_99] : memref<1x8x128xf32, #tpu.memory_space<vmem>>, vector<1x8x128xf32>
    %364 = vector.shape_cast %363 : vector<1x8x128xf32> to vector<8x128xf32>
    %365 = vector.shape_cast %362 : vector<8x128xf32> to vector<1x8x128xf32>
    tpu.vector_store %arg10[%c0_97, %c0_98, %c0_99], %365 {strides = array<i32>} : memref<1x8x128xf32, #tpu.memory_space<vmem>>, vector<1x8x128xf32>,
    return
  }
  func.func @transform_0(%arg0: i32, %arg1: i32) -> (i32, i32) {
    %c0_i32 = arith.constant 0 : i32
    %c0_i32_0 = arith.constant 0 : i32
    %c0_i32_1 = arith.constant 0 : i32
    return %c0_i32, %c0_i32_0 : i32, i32
  }
  func.func @transform_1(%arg0: i32, %arg1: i32) -> (i32, i32) {
    %c0_i32 = arith.constant 0 : i32
    %c0_i32_0 = arith.constant 0 : i32
    %c0_i32_1 = arith.constant 0 : i32
    return %c0_i32, %c0_i32_0 : i32, i32
  }
  func.func @transform_2(%arg0: i32, %arg1: i32) -> (i32, i32) {
    %c0_i32 = arith.constant 0 : i32
    %c0_i32_0 = arith.constant 0 : i32
    %c0_i32_1 = arith.constant 0 : i32
    return %c0_i32, %c0_i32_0 : i32, i32
  }
  func.func @transform_3(%arg0: i32, %arg1: i32) -> (i32, i32) {
    %c0_i32 = arith.constant 0 : i32
    %c0_i32_0 = arith.constant 0 : i32
    %c0_i32_1 = arith.constant 0 : i32
    return %c0_i32, %c0_i32_0 : i32, i32
  }
  func.func @transform_4(%arg0: i32, %arg1: i32) -> (i32, i32) {
    %c0_i32 = arith.constant 0 : i32
    %c0_i32_0 = arith.constant 0 : i32
    %c0_i32_1 = arith.constant 0 : i32
    return %c0_i32, %c0_i32_0 : i32, i32
  }
  func.func @transform_5(%arg0: i32, %arg1: i32) -> (i32, i32, i32) {
    %c0_i32 = arith.constant 0 : i32
    %c0_i32_0 = arith.constant 0 : i32
    %c0_i32_1 = arith.constant 0 : i32
    return %arg0, %c0_i32, %c0_i32_0 : i32, i32, i32
  }
  func.func @transform_6(%arg0: i32, %arg1: i32) -> (i32, i32) {
    %c0_i32 = arith.constant 0 : i32
    %c0_i32_0 = arith.constant 0 : i32
    %c0_i32_1 = arith.constant 0 : i32
    return %c0_i32, %c0_i32_0 : i32, i32
  }
  func.func @transform_7(%arg0: i32, %arg1: i32) -> (i32, i32) {
    %c0_i32 = arith.constant 0 : i32
    %c0_i32_0 = arith.constant 0 : i32
    %c0_i32_1 = arith.constant 0 : i32
    return %c0_i32, %c0_i32_0 : i32, i32
  }
  func.func @transform_8(%arg0: i32, %arg1: i32) -> (i32, i32, i32) {
    %c0_i32 = arith.constant 0 : i32
    %c0_i32_0 = arith.constant 0 : i32
    return %arg0, %c0_i32, %arg1 : i32, i32, i32
  }
  func.func @transform_9(%arg0: i32, %arg1: i32) -> (i32, i32, i32, i32, i32) {
    %c0_i32 = arith.constant 0 : i32
    %c0_i32_0 = arith.constant 0 : i32
    %c0_i32_1 = arith.constant 0 : i32
    %c0_i32_2 = arith.constant 0 : i32
    return %arg0, %arg1, %c0_i32, %c0_i32_0, %c0_i32_1 : i32, i32, i32, i32, i32
  }
}

</mosaic_0001>

<llo_original>
// kernel: custom-call.22
$region0: #{custom-call.22}
  %s0 = inlined_call_operand.hbm [shape: f32[2,2,3,3], index: 0, kind: input, shape index: {}]
  %s1 = inlined_call_operand.vmem [shape: f32[2,2,3,3], index: 1, kind: output, shape index: {0}]
  %s2 = inlined_call_operand.hbm [shape: s32[2,2,3], index: 2, kind: output, shape index: {1}]
  %s3 = inlined_call_operand.vmem [shape: s32[2,2,3], index: 3, kind: output, shape index: {2}]
  %4 = xla_tuple %s1, %s2, %s3
  $region1: #{custom-call.22} parent=0
    #allocation0 [shape = 'u8[4096]{0}', space=vmem, size = 0x1000, scoped, tag = 'operand span for operand 0']
    #allocation1 [shape = 'u8[4096]{0}', space=vmem, size = 0x1000, scoped, tag = 'packed  for operand 0']
    #allocation2 [shape = 's32[2]{0}', space=sflag, size = 0x8, scoped, tag = 'scoped memory for custom-call.22']
    #allocation3 [shape = 's32[2]{0}', space=sflag, size = 0x8, scoped, tag = 'scoped memory for custom-call.22']
    #allocation4 [shape = 'u8[4096]{0}', space=vmem, size = 0x1000, scoped, tag = 'operand span for operand 1']
    #allocation5 [shape = 'u8[4096]{0}', space=vmem, size = 0x1000, scoped, tag = 'packed  for operand 1']
    #allocation6 [shape = 'u8[4096]{0}', space=vmem, size = 0x1000, scoped, tag = 'operand span for operand 2']
    #allocation7 [shape = 'u8[2048]{0}', space=vmem, size = 0x800, scoped, tag = 'packed  for operand 2']
    #allocation8 [shape = 'u8[4096]{0}', space=vmem, size = 0x1000, scoped, tag = 'operand span for operand 3']
    #allocation9 [shape = 'u8[2048]{0}', space=vmem, size = 0x800, scoped, tag = 'packed  for operand 3']
    %5 = vsyncpa [#allocation2], 0
    %s6 = scalar_lea.sflag [#allocation2], 1
    %7 = vsyncpa %s6, 0
    %8 = vsyncpa [#allocation3], 0
    %s9 = scalar_lea.sflag [#allocation3], 1
    %10 = vsyncpa %s9, 0
    loop: start=0, step=1, limit=6
    $region2: #{custom-call.22} parent=1 // loop_pre_header
      _
    $region3: #{custom-call.22} parent=1 // loop_header
      %s12 = sphi 0, %s16
      %p13 = scmp.ge.s32.totalorder %s12, 6
      %s19 = sphi 0, %s31
      %s20 = sphi 0, %s27
      %s21 = sphi 0, %s19
      %s22 = sphi 0, %s20
      %s23 = sphi 0, %s21
      %s24 = sphi 0, %s22
      %s38 = sphi 0, %s40
      %s41 = sphi 0, %s38
      %s42 = sphi 0, %s41
      %s58 = sphi 0, %s42
      %s68 = sphi 0, %s70
      %s71 = sphi 0, %s68
      %s72 = sphi 0, %s71
      %s88 = sphi 0, %s72
    $region4: #{custom-call.22} parent=1 // loop_header_branch
      %15 = sbr.rel (%p13) target = $region8
    $region5: #{custom-call.22} parent=1 // loop_body
      %s17 = ssub.s32 %s12, 1
      %s18 = ssub.s32 %s12, 2
      %s25 = sadd.s32 1, %s20
      %p26 = scmp.ge.s32.totalorder %s25, 2
      %s27 = scalar_select %p26, 0, %s25
      %s28 = sadd.s32 1, %s19
      %s29 = scalar_select %p26, %s28, %s19
      %p30 = scmp.ge.s32.totalorder %s29, 2
      %s31 = scalar_select %p30, 0, %s29
      %s32 = sshrl.u32 %s20, 3
      %s33 = sshrl.u32 %s27, 3
      %s34 = ssub.s32 %s19, %s31
      %s35 = ssub.s32 %s32, %s33
      %s36 = sor.u32 %s34, %s35
      %p37 = scmp.eq.s32.totalorder %s36, 0
      %s39 = sadd.s32 %s38, 1
      %s40 = scalar_select %p37, %s38, %s39
      %p43 = pneg %p37
      %p44 = scmp.eq.s32.totalorder %s12, 3
      %p45 = por %p43, %p44
      %p46 = scmp.ne.s32.totalorder %s38, %s41
      %p47 = scmp.eq.s32.totalorder %s12, 0
      %p48 = por %p46, %p47
      %p49 = scmp.ne.s32.totalorder %s38, %s41
      %p50 = scmp.eq.s32.totalorder %s17, 3
      %p51 = por %p49, %p50
      %p52 = scmp.ne.s32.totalorder %s41, %s42
      %p53 = scmp.eq.s32.totalorder %s17, 0
      %p54 = por %p52, %p53
      %p55 = scmp.ne.s32.totalorder %s41, %s42
      %p56 = scmp.eq.s32.totalorder %s18, 3
      %p57 = por %p55, %p56
      %p59 = scmp.ne.s32.totalorder %s42, %s58
      %p60 = scmp.eq.s32.totalorder %s18, 0
      %p61 = por %p59, %p60
      %s62 = sshrl.u32 %s20, 3
      %s63 = sshrl.u32 %s27, 3
      %s64 = ssub.s32 %s19, %s31
      %s65 = ssub.s32 %s62, %s63
      %s66 = sor.u32 %s64, %s65
      %p67 = scmp.eq.s32.totalorder %s66, 0
      %s69 = sadd.s32 %s68, 1
      %s70 = scalar_select %p67, %s68, %s69
      %p73 = pneg %p67
      %p74 = scmp.eq.s32.totalorder %s12, 3
      %p75 = por %p73, %p74
      %p76 = scmp.ne.s32.totalorder %s68, %s71
      %p77 = scmp.eq.s32.totalorder %s12, 0
      %p78 = por %p76, %p77
      %p79 = scmp.ne.s32.totalorder %s68, %s71
      %p80 = scmp.eq.s32.totalorder %s17, 3
      %p81 = por %p79, %p80
      %p82 = scmp.ne.s32.totalorder %s71, %s72
      %p83 = scmp.eq.s32.totalorder %s17, 0
      %p84 = por %p82, %p83
      %p85 = scmp.ne.s32.totalorder %s71, %s72
      %p86 = scmp.eq.s32.totalorder %s18, 3
      %p87 = por %p85, %p86
      %p89 = scmp.ne.s32.totalorder %s72, %s88
      %p90 = scmp.eq.s32.totalorder %s18, 0
      %p91 = por %p89, %p90
      %p92 = scmp.le.s32.totalorder 1, %s12
      %p93 = scmp.lt.s32.totalorder %s12, 5
      %p94 = pnand %p92, %p93
      %p95 = pneg %p94
      // Predicated region
      $region9: #{custom-call.22} parent=5 // pred_check
        _
      $region10: #{custom-call.22} parent=5 // pred_check_branch
        %97 = sbr.rel (%p94) target = $region12
      $region11: #{custom-call.22} parent=5 // pred_region
        %s98 = ssub.s32 %s12, 1
      $region12: #{custom-call.22} parent=5 // pred_fallthru
        _
      %p99 = scmp.lt.s32.totalorder %s12, 4
      // Predicated region
      $region13: #{custom-call.22} parent=5 // pred_check
        %p100 = pneg %p99
      $region14: #{custom-call.22} parent=5 // pred_check_branch
        %102 = sbr.rel (%p100) target = $region16
      $region15: #{custom-call.22} parent=5 // pred_region
        %s103 = sand.u32 %s12, 1
        %s104 = scalar_lea.sflag [#allocation2], %s103
        %s105 = sand.u32 %s12, 1
        %s106 = smul.addr %s105, 4
        %s107 = scalar_lea.vmem [#allocation1], %s106
        %s109 = ssub.s32 64, 64
        %110 = vsyncadd %s104, %s109
        %s111 = smul.addr %s19, 2
        %s112 = sadd.s32 %s20, %s111
        %s113 = smul.addr %s112, 64
        %s114 = scalar_lea.hbm %s0, %s113
        %s116 = sshll.u32 %s107, 4
        %s117 = int_to_ptr.vmem [resolvable:$true] %s116
        %119 = dma.hbm_to_vmem [thread:$0]  %s114, 64, %s117, %s104
      $region16: #{custom-call.22} parent=5 // pred_fallthru
        _
      %p120 = scmp.le.s32.totalorder 1, %s12
      %p121 = scmp.lt.s32.totalorder %s12, 5
      %p122 = pnand %p120, %p121
      %p123 = pneg %p122
      // Predicated region
      $region17: #{custom-call.22} parent=5 // pred_check
        _
      $region18: #{custom-call.22} parent=5 // pred_check_branch
        %125 = sbr.rel (%p122) target = $region20
      $region19: #{custom-call.22} parent=5 // pred_region
        #allocation10 [shape = 's32[3,128]{1,0}', space=vmem, size = 0x1000, scoped, tag = 'scratch for permutations']
        %s126 = ssub.s32 %s12, 1
        %s127 = sand.u32 %s17, 1
        %s128 = scalar_lea.sflag [#allocation2], %s127
        %s129 = sand.u32 %s17, 1
        %s130 = smul.addr %s129, 4
        %s131 = scalar_lea.vmem [#allocation1], %s130
        %132 = dma.done %s128, 64
        %s133 = sand.u32 %s17, 1
        %s134 = scalar_lea.sflag [#allocation2], %s133
        %s135 = sand.u32 %s17, 1
        %s136 = smul.addr %s135, 4
        %s137 = scalar_lea.vmem [#allocation1], %s136
        %s138 = sand.u32 %s17, 1
        %s139 = sand.u32 %s17, 1
        %s140 = smul.addr %s139, 4
        %s141 = scalar_lea.vmem [#allocation5], %s140
        %p142 = pneg %p54
        %p143 = pneg %p51
        %s144 = sand.u32 %s41, 1
        %s145 = scalar_lea.sflag [#allocation3], %s144
        %s146 = sand.u32 %s41, 1
        %s147 = smul.addr %s146, 2
        %s148 = scalar_lea.vmem [#allocation7], %s147
        %p149 = pneg %p84
        %p150 = pneg %p81
        %s151 = sand.u32 %s71, 1
        %s152 = sand.u32 %s71, 1
        %s153 = smul.addr %s152, 2
        %s154 = scalar_lea.vmem [#allocation9], %s153
        %s156 = sshllo.u32 0, 4
        %v157 = vld [vmem:[%s137] sm:%s156]
        %158 = vst [vmem:[#allocation0] sm:%s156] %v157
        %s159 = sshrl.u32 %s22, 3
        %s160 = sshrl.u32 %s22, 3
        %v161 = vld [vmem:[#allocation0] sm:$0xff]
        %162 = vst [vmem:[#allocation4] sm:$0xff] %v161
        %s163 = sand.u32 %s22, 7
        %s164 = scalar_lea.vmem [#allocation6], %s163
        %s165 = sand.u32 %s22, 7
        %s166 = scalar_lea.vmem [#allocation8], %s165
        %167 = vst [vmem:[%s164] sm:$0x1] 0
        %v168 = vlaneseq
        %v169 = vshrl.u32 %v168, 7
        %v170 = vmov %v169
        %172 = vst [vmem:[#allocation10] sm:$0xff] %v170
        loop: start=0, step=1, limit=3
        $region22: #{custom-call.22} parent=19 // loop_pre_header
          _
        $region23: #{custom-call.22} parent=19 // loop_header
          %s174 = sphi 0, %s178
          %p175 = scmp.ge.s32.totalorder %s174, 3
        $region24: #{custom-call.22} parent=19 // loop_header_branch
          %177 = sbr.rel (%p175) target = $region28
        $region25: #{custom-call.22} parent=19 // loop_body
          %v179 = vstv %s174
          %v180 = vlaneseq
          %v181 = vshrl.u32 %v180, 7
          %v182 = vmov %v181
          %v183 = vld [vmem:[#allocation4] sm:$0xff]
          %v184 = vand.u32 2147483647, %v183
          %v186 = vstv %s174
          %vm187 = vcmp.ge.s32.totalorder %v182, %v186
          %vm188 = vcmp.lt.s32.totalorder %v182, 3
          %vm189 = vmand %vm187, %vm188
          %vm190 = vcmp.lt.f32.partialorder -inf, %v184
          %vm191 = vmand %vm189, %vm190
          %v192 = vsel %vm191, %v182, %v179
          %v193 = vsel %vm191, %v184, -inf
          %v194 = vrot.slane %v193, 1
          %v195 = vrot.slane %v192, 1
          %vm196 = vcmp.ge.f32.partialorder %v194, %v193
          %v197 = vsel %vm196, %v194, %v193
          %v198 = vsel %vm196, %v195, %v192
          %v199 = vrot.slane %v194, 1
          %v200 = vrot.slane %v195, 1
          %vm201 = vcmp.ge.f32.partialorder %v199, %v197
          %v202 = vsel %vm201, %v199, %v197
          %v203 = vsel %vm201, %v200, %v198
          %v204 = vrot.slane %v199, 1
          %v205 = vrot.slane %v200, 1
          %vm206 = vcmp.ge.f32.partialorder %v204, %v202
          %v207 = vsel %vm206, %v204, %v202
          %v208 = vsel %vm206, %v205, %v203
          %v209 = vrot.slane %v204, 1
          %v210 = vrot.slane %v205, 1
          %vm211 = vcmp.ge.f32.partialorder %v209, %v207
          %v212 = vsel %vm211, %v209, %v207
          %v213 = vsel %vm211, %v210, %v208
          %v214 = vrot.slane %v209, 1
          %v215 = vrot.slane %v210, 1
          %vm216 = vcmp.ge.f32.partialorder %v214, %v212
          %v217 = vsel %vm216, %v214, %v212
          %v218 = vsel %vm216, %v215, %v213
          %v219 = vrot.slane %v214, 1
          %v220 = vrot.slane %v215, 1
          %vm221 = vcmp.ge.f32.partialorder %v219, %v217
          %v222 = vsel %vm221, %v219, %v217
          %v223 = vsel %vm221, %v220, %v218
          %v224 = vrot.slane %v219, 1
          %v225 = vrot.slane %v220, 1
          %vm226 = vcmp.ge.f32.partialorder %v224, %v222
          %v227 = vsel %vm226, %v224, %v222
          %v228 = vsel %vm226, %v225, %v223
          %s229 = ssub.s32 128, %s174
          %230 = vrot.lane.b32.xlu0 %v228, %s229
          %v231 = vpop.permute.xlu0 %230
          %s232 = vtos %v231
          %v233 = vstv %s174
          %v234 = vlaneseq
          %v235 = vand.u32 %v234, 127
          %vm236 = vcmp.eq.s32.totalorder %v235, %v233
          %v237 = vstv %s232
          %v238 = vld [vmem:[%s164] ss:$0 sm:$0xff]
          %v239 = vsel %vm236, %v237, %v238
          %240 = vst [vmem:[%s164] sm:$0x1] %v239
          %s241 = scalar_lea.vmem [#allocation4], %s174
          %s242 = scalar_lea.vmem [#allocation4], %s232
          %v243 = vld [vmem:[%s241] ss:$0 sm:$0xff]
          %v244 = vld [vmem:[%s242] ss:$0 sm:$0xff]
          %245 = vst [vmem:[%s242] sm:$0x1] %v243
          %246 = vst [vmem:[%s241] sm:$0x1] %v244
          %s247 = scalar_lea.vmem [#allocation10], %s174
          %s248 = scalar_lea.vmem [#allocation10], %s232
          %v249 = vld [vmem:[%s247] ss:$0 sm:$0xff]
          %v250 = vld [vmem:[%s248] ss:$0 sm:$0xff]
          %251 = vst [vmem:[%s248] sm:$0x1] %v249
          %252 = vst [vmem:[%s247] sm:$0x1] %v250
          %vm253 = vcmp.ne.f32.partialorder %v244, 0.0
          %vm254 = vmand %vm236, %vm253
          %v255 = vsel %vm254, %v244, 1.0
          %v256 = vlaneseq
          %v257 = vand.u32 %v256, 127
          %v258 = vstv %s174
          %vm259 = vcmp.gt.s32.totalorder %v257, %v258
          %v260 = vsel %vm259, %v244, 0.0
          %v261 = vlaneseq
          %v262 = vshrl.u32 %v261, 7
          %v263 = vmov %v262
          %v264 = vld [vmem:[#allocation4] sm:$0xff]
          %v266 = vstv %s174
          %vm267 = vcmp.gt.s32.totalorder %v263, %v266
          %v268 = vsel %vm267, %v255, 1.0
          %v269 = vrcp.pop %v268
          %v270 = vmul.f32 %v264, %v269
          %vm271 = vmand %vm267, %vm236
          %v272 = vsel %vm271, %v270, 0.0
          %273 = vadd.xlane.f32.xlu0 %v272
          %v274 = vpop.xlane.xlu0 %273
          %v275 = vmul.f32 %v274, %v260
          %v276 = vsub.f32 %v270, %v275
          %277 = vst [vmem:[#allocation4] sm:$0xff] %v276
        $region26: #{custom-call.22} parent=19 // loop_footer
          %s178 = sadd.s32 1, %s174
        $region27: #{custom-call.22} parent=19 // loop_footer_branch
          %173 = sbr.rel target = $region23
        $region28: #{custom-call.22} parent=19 // loop_exit
          _
        %v278 = vld [vmem:[#allocation10] sm:$0xff]
        %s279 = scalar_lea.vmem [#allocation10], 8
        %s280 = scalar_lea.vmem [#allocation10], 16
        %s281 = scalar_lea.vmem [#allocation10], 24
        %s282 = scalar_lea.vmem [#allocation10], 32
        %s283 = scalar_lea.vmem [#allocation10], 40
        %s284 = scalar_lea.vmem [#allocation10], 48
        %s285 = scalar_lea.vmem [#allocation10], 56
        %s286 = scalar_lea.vmem [#allocation10], 64
        %s287 = scalar_lea.vmem [#allocation10], 72
        %s288 = scalar_lea.vmem [#allocation10], 80
        %s289 = scalar_lea.vmem [#allocation10], 88
        %s290 = scalar_lea.vmem [#allocation10], 96
        %s291 = scalar_lea.vmem [#allocation10], 104
        %s292 = scalar_lea.vmem [#allocation10], 112
        %s293 = scalar_lea.vmem [#allocation10], 120
        %294 = vxpose.xlu0.b32.start [1/16] %v278, 128
        %295 = vxpose.xlu0.b32.cont [2/16] 0, 128
        %296 = vxpose.xlu0.b32.cont [3/16] 0, 128
        %297 = vxpose.xlu0.b32.cont [4/16] 0, 128
        %298 = vxpose.xlu0.b32.cont [5/16] 0, 128
        %299 = vxpose.xlu0.b32.cont [6/16] 0, 128
        %300 = vxpose.xlu0.b32.cont [7/16] 0, 128
        %301 = vxpose.xlu0.b32.cont [8/16] 0, 128
        %302 = vxpose.xlu0.b32.cont [9/16] 0, 128
        %303 = vxpose.xlu0.b32.cont [10/16] 0, 128
        %304 = vxpose.xlu0.b32.cont [11/16] 0, 128
        %305 = vxpose.xlu0.b32.cont [12/16] 0, 128
        %306 = vxpose.xlu0.b32.cont [13/16] 0, 128
        %307 = vxpose.xlu0.b32.cont [14/16] 0, 128
        %308 = vxpose.xlu0.b32.cont [15/16] 0, 128
        %309 = vxpose.xlu0.b32.end [16/16] 0, 128
        %v310 = vpop.trf.xlu0
        %v311 = vpop.trf.xlu0
        %v312 = vpop.trf.xlu0
        %v313 = vpop.trf.xlu0
        %v314 = vpop.trf.xlu0
        %v315 = vpop.trf.xlu0
        %v316 = vpop.trf.xlu0
        %v317 = vpop.trf.xlu0
        %v318 = vpop.trf.xlu0
        %v319 = vpop.trf.xlu0
        %v320 = vpop.trf.xlu0
        %v321 = vpop.trf.xlu0
        %v322 = vpop.trf.xlu0
        %v323 = vpop.trf.xlu0
        %v324 = vpop.trf.xlu0
        %v325 = vpop.trf.xlu0
        %326 = vst [vmem:[%s166] sm:$0x1] %v310
        %s328 = sshllo.u32 0, 4
        %v330 = vld [vmem:[#allocation4] sm:%s328]
        %s331 = sshllo.u32 0, 4
        %332 = vst [vmem:[%s141] sm:%s331] %v330
        %s334 = sshllo.u32 0, 2
        %v336 = vld [vmem:[#allocation6] sm:%s334]
        %s337 = sshllo.u32 0, 2
        %338 = vst [vmem:[%s148] sm:%s337] %v336
        %s340 = sshllo.u32 0, 2
        %v342 = vld [vmem:[#allocation8] sm:%s340]
        %s343 = sshllo.u32 0, 2
        %344 = vst [vmem:[%s154] sm:%s343] %v342
        %s345 = sand.u32 %s17, 1
        %s346 = sand.u32 %s17, 1
        %s347 = smul.addr %s346, 4
        %s348 = scalar_lea.vmem [#allocation5], %s347
        %s349 = sand.u32 %s41, 1
        %s350 = scalar_lea.sflag [#allocation3], %s349
        %s351 = sand.u32 %s41, 1
        %s352 = smul.addr %s351, 2
        %s353 = scalar_lea.vmem [#allocation7], %s352
        %s354 = sand.u32 %s71, 1
        %s355 = sand.u32 %s71, 1
        %s356 = smul.addr %s355, 2
        %s357 = scalar_lea.vmem [#allocation9], %s356
        %s358 = smul.addr %s21, 2
        %s359 = sadd.s32 %s22, %s358
        %s360 = smul.addr %s359, 4
        %s361 = scalar_lea.vmem %s1, %s360
        // Predicated region
        $region29: #{custom-call.22} parent=19 // pred_check
          _
        $region30: #{custom-call.22} parent=19 // pred_check_branch
          %363 = sbr.rel (0) target = $region32
        $region31: #{custom-call.22} parent=19 // pred_region
          // Predicated region
          $region33: #{custom-call.22} parent=31 // pred_check
            _
          $region34: #{custom-call.22} parent=31 // pred_check_branch
            %365 = sbr.rel target = $region36
          $region35: #{custom-call.22} parent=31 // pred_region
            // Predicated region
            $region48: #{custom-call.22} parent=35 // pred_check
              _
            $region49: #{custom-call.22} parent=35 // pred_check_branch
              %380 = sbr.rel (0) target = $region51
            $region50: #{custom-call.22} parent=35 // pred_region
              loop: start=0, step=1, limit=1
              $region52: #{custom-call.22} parent=50 // loop_pre_header
                _
              $region53: #{custom-call.22} parent=50 // loop_header
                %s383 = sphi 0, %s387
                %p384 = scmp.ge.s32.totalorder %s383, 1
                %s388 = sphi %s348, %s348
                %s389 = sphi %s361, %s361
              $region54: #{custom-call.22} parent=50 // loop_header_branch
                %386 = sbr.rel (%p384) target = $region58
              $region55: #{custom-call.22} parent=50 // loop_body
                %v390 = vld [vmem:[%s388] sm:$0xf]
                %391 = vst [vmem:[%s389] sm:$0xf] %v390
              $region56: #{custom-call.22} parent=50 // loop_footer
                %s387 = sadd.s32 1, %s383
              $region57: #{custom-call.22} parent=50 // loop_footer_branch
                %382 = sbr.rel target = $region53
              $region58: #{custom-call.22} parent=50 // loop_exit
                _
            $region51: #{custom-call.22} parent=35 // pred_fallthru
              _
          $region36: #{custom-call.22} parent=31 // pred_fallthru
            _
          // Predicated region
          $region37: #{custom-call.22} parent=31 // pred_check
            _
          $region38: #{custom-call.22} parent=31 // pred_check_branch
            %367 = sbr.rel (0) target = $region40
          $region39: #{custom-call.22} parent=31 // pred_region
            loop: start=0, step=1, limit=1
            $region41: #{custom-call.22} parent=39 // loop_pre_header
              _
            $region42: #{custom-call.22} parent=39 // loop_header
              %s370 = sphi 0, %s374
              %p371 = scmp.ge.s32.totalorder %s370, 1
              %s375 = sphi %s348, %s348
              %s376 = sphi %s361, %s361
            $region43: #{custom-call.22} parent=39 // loop_header_branch
              %373 = sbr.rel (%p371) target = $region47
            $region44: #{custom-call.22} parent=39 // loop_body
              %v377 = vld [vmem:[%s375] sm:$0xf]
              %378 = vst [vmem:[%s376] sm:$0xf] %v377
            $region45: #{custom-call.22} parent=39 // loop_footer
              %s374 = sadd.s32 1, %s370
            $region46: #{custom-call.22} parent=39 // loop_footer_branch
              %369 = sbr.rel target = $region42
            $region47: #{custom-call.22} parent=39 // loop_exit
              _
          $region40: #{custom-call.22} parent=31 // pred_fallthru
            _
        $region32: #{custom-call.22} parent=19 // pred_fallthru
          _
        %392 = vnop
        // Predicated region
        $region59: #{custom-call.22} parent=19 // pred_check
          %p393 = pneg %p51
        $region60: #{custom-call.22} parent=19 // pred_check_branch
          %395 = sbr.rel (%p393) target = $region62
        $region61: #{custom-call.22} parent=19 // pred_region
          %s396 = sshrl.u32 %s22, 3
          %s398 = ssub.s32 32, 32
          %399 = vsyncadd %s350, %s398
          %s400 = sadd.s32 %s396, %s21
          %s401 = smul.addr %s400, 32
          %s402 = scalar_lea.hbm %s2, %s401
          %s404 = sshll.u32 %s353, 4
          %s405 = int_to_ptr.vmem [resolvable:$true] %s404
          %407 = dma.vmem_to_hbm [thread:$0]  %s405, 32, %s402, %s350
        $region62: #{custom-call.22} parent=19 // pred_fallthru
          _
        // Predicated region
        $region63: #{custom-call.22} parent=19 // pred_check
          %p408 = pneg %p81
        $region64: #{custom-call.22} parent=19 // pred_check_branch
          %410 = sbr.rel (%p408) target = $region66
        $region65: #{custom-call.22} parent=19 // pred_region
          %s411 = sshrl.u32 %s22, 3
          %s412 = sadd.s32 %s411, %s21
          %s413 = smul.addr %s412, 2
          %s414 = scalar_lea.vmem %s3, %s413
          // Predicated region
          $region67: #{custom-call.22} parent=65 // pred_check
            _
          $region68: #{custom-call.22} parent=65 // pred_check_branch
            %416 = sbr.rel (0) target = $region70
          $region69: #{custom-call.22} parent=65 // pred_region
            // Predicated region
            $region71: #{custom-call.22} parent=69 // pred_check
              _
            $region72: #{custom-call.22} parent=69 // pred_check_branch
              %418 = sbr.rel target = $region74
            $region73: #{custom-call.22} parent=69 // pred_region
              // Predicated region
              $region86: #{custom-call.22} parent=73 // pred_check
                _
              $region87: #{custom-call.22} parent=73 // pred_check_branch
                %433 = sbr.rel (0) target = $region89
              $region88: #{custom-call.22} parent=73 // pred_region
                loop: start=0, step=1, limit=1
                $region90: #{custom-call.22} parent=88 // loop_pre_header
                  _
                $region91: #{custom-call.22} parent=88 // loop_header
                  %s436 = sphi 0, %s440
                  %p437 = scmp.ge.s32.totalorder %s436, 1
                  %s441 = sphi %s357, %s357
                  %s442 = sphi %s414, %s414
                $region92: #{custom-call.22} parent=88 // loop_header_branch
                  %439 = sbr.rel (%p437) target = $region96
                $region93: #{custom-call.22} parent=88 // loop_body
                  %v443 = vld [vmem:[%s441] sm:$0x3]
                  %444 = vst [vmem:[%s442] sm:$0x3] %v443
                $region94: #{custom-call.22} parent=88 // loop_footer
                  %s440 = sadd.s32 1, %s436
                $region95: #{custom-call.22} parent=88 // loop_footer_branch
                  %435 = sbr.rel target = $region91
                $region96: #{custom-call.22} parent=88 // loop_exit
                  _
              $region89: #{custom-call.22} parent=73 // pred_fallthru
                _
            $region74: #{custom-call.22} parent=69 // pred_fallthru
              _
            // Predicated region
            $region75: #{custom-call.22} parent=69 // pred_check
              _
            $region76: #{custom-call.22} parent=69 // pred_check_branch
              %420 = sbr.rel (0) target = $region78
            $region77: #{custom-call.22} parent=69 // pred_region
              loop: start=0, step=1, limit=1
              $region79: #{custom-call.22} parent=77 // loop_pre_header
                _
              $region80: #{custom-call.22} parent=77 // loop_header
                %s423 = sphi 0, %s427
                %p424 = scmp.ge.s32.totalorder %s423, 1
                %s428 = sphi %s357, %s357
                %s429 = sphi %s414, %s414
              $region81: #{custom-call.22} parent=77 // loop_header_branch
                %426 = sbr.rel (%p424) target = $region85
              $region82: #{custom-call.22} parent=77 // loop_body
                %v430 = vld [vmem:[%s428] sm:$0x3]
                %431 = vst [vmem:[%s429] sm:$0x3] %v430
              $region83: #{custom-call.22} parent=77 // loop_footer
                %s427 = sadd.s32 1, %s423
              $region84: #{custom-call.22} parent=77 // loop_footer_branch
                %422 = sbr.rel target = $region80
              $region85: #{custom-call.22} parent=77 // loop_exit
                _
            $region78: #{custom-call.22} parent=69 // pred_fallthru
              _
          $region70: #{custom-call.22} parent=65 // pred_fallthru
            _
          %445 = vnop
        $region66: #{custom-call.22} parent=19 // pred_fallthru
          _
      $region20: #{custom-call.22} parent=5 // pred_fallthru
        _
      %p446 = scmp.le.s32.totalorder 2, %s12
      // Predicated region
      $region97: #{custom-call.22} parent=5 // pred_check
        %p447 = pneg %p446
      $region98: #{custom-call.22} parent=5 // pred_check_branch
        %449 = sbr.rel (%p447) target = $region100
      $region99: #{custom-call.22} parent=5 // pred_region
        %s450 = ssub.s32 %s12, 2
        %s451 = sand.u32 %s18, 1
        %s452 = sand.u32 %s18, 1
        %s453 = smul.addr %s452, 4
        %s454 = scalar_lea.vmem [#allocation5], %s453
        // Predicated region
        $region101: #{custom-call.22} parent=99 // pred_check
          %p455 = pneg %p57
        $region102: #{custom-call.22} parent=99 // pred_check_branch
          %457 = sbr.rel (%p455) target = $region104
        $region103: #{custom-call.22} parent=99 // pred_region
          %s458 = sand.u32 %s42, 1
          %s459 = scalar_lea.sflag [#allocation3], %s458
          %s460 = sand.u32 %s42, 1
          %s461 = smul.addr %s460, 2
          %s462 = scalar_lea.vmem [#allocation7], %s461
          %463 = dma.done %s459, 32
        $region104: #{custom-call.22} parent=99 // pred_fallthru
          _
        // Predicated region
        $region105: #{custom-call.22} parent=99 // pred_check
          %p464 = pneg %p87
        $region106: #{custom-call.22} parent=99 // pred_check_branch
          %466 = sbr.rel (%p464) target = $region108
        $region107: #{custom-call.22} parent=99 // pred_region
          %s467 = sand.u32 %s72, 1
          %s468 = sand.u32 %s72, 1
          %s469 = smul.addr %s468, 2
          %s470 = scalar_lea.vmem [#allocation9], %s469
        $region108: #{custom-call.22} parent=99 // pred_fallthru
          _
      $region100: #{custom-call.22} parent=5 // pred_fallthru
        _
    $region6: #{custom-call.22} parent=1 // loop_footer
      %s16 = sadd.s32 1, %s12
    $region7: #{custom-call.22} parent=1 // loop_footer_branch
      %11 = sbr.rel target = $region3
    $region8: #{custom-call.22} parent=1 // loop_exit
      _
    %471 = vsyncpa [#allocation2], 1
    %s472 = scalar_lea.sflag [#allocation2], 1
    %473 = vsyncpa %s472, 1
    %474 = vsyncpa [#allocation3], 1
    %s475 = scalar_lea.sflag [#allocation3], 1
    %476 = vsyncpa %s475, 1

// kernel: custom-call.29
$region0: #{custom-call.29}
  %s0 = inlined_call_operand.vmem [shape: f32[2,2,1,3,3], index: 0, kind: input, shape index: {}]
  %s1 = inlined_call_operand.vmem [shape: f32[2,2,1,3,3], index: 1, kind: output, shape index: {}]
  $region1: #{custom-call.29} parent=0
    #allocation0 [shape = 'u8[4096]{0}', space=vmem, size = 0x1000, scoped, tag = 'operand span for operand 0']
    #allocation1 [shape = 'u8[4096]{0}', space=vmem, size = 0x1000, scoped, tag = 'packed  for operand 0']
    #allocation2 [shape = 'u8[4096]{0}', space=vmem, size = 0x1000, scoped, tag = 'operand span for operand 1']
    #allocation3 [shape = 'u8[4096]{0}', space=vmem, size = 0x1000, scoped, tag = 'packed  for operand 1']
    loop: start=0, step=1, limit=6
    $region2: #{custom-call.29} parent=1 // loop_pre_header
      _
    $region3: #{custom-call.29} parent=1 // loop_header
      %s3 = sphi 0, %s7
      %p4 = scmp.ge.s32.totalorder %s3, 6
      %s10 = sphi 0, %s43
      %s11 = sphi 0, %s39
      %s12 = sphi 0, %s35
      %s13 = sphi 0, %s31
      %s14 = sphi 0, %s27
      %s15 = sphi 0, %s10
      %s16 = sphi 0, %s11
      %s17 = sphi 0, %s12
      %s18 = sphi 0, %s13
      %s19 = sphi 0, %s14
      %s20 = sphi 0, %s15
      %s21 = sphi 0, %s16
      %s22 = sphi 0, %s17
      %s23 = sphi 0, %s18
      %s24 = sphi 0, %s19
    $region4: #{custom-call.29} parent=1 // loop_header_branch
      %6 = sbr.rel (%p4) target = $region8
    $region5: #{custom-call.29} parent=1 // loop_body
      %s8 = ssub.s32 %s3, 1
      %s9 = ssub.s32 %s3, 2
      %s25 = sadd.s32 1, %s14
      %p26 = scmp.ge.s32.totalorder %s25, 1
      %s27 = scalar_select %p26, 0, %s25
      %s28 = sadd.s32 1, %s13
      %s29 = scalar_select %p26, %s28, %s13
      %p30 = scmp.ge.s32.totalorder %s29, 1
      %s31 = scalar_select %p30, 0, %s29
      %s32 = sadd.s32 1, %s12
      %s33 = scalar_select %p30, %s32, %s12
      %p34 = scmp.ge.s32.totalorder %s33, 1
      %s35 = scalar_select %p34, 0, %s33
      %s36 = sadd.s32 1, %s11
      %s37 = scalar_select %p34, %s36, %s11
      %p38 = scmp.ge.s32.totalorder %s37, 2
      %s39 = scalar_select %p38, 0, %s37
      %s40 = sadd.s32 1, %s10
      %s41 = scalar_select %p38, %s40, %s10
      %p42 = scmp.ge.s32.totalorder %s41, 2
      %s43 = scalar_select %p42, 0, %s41
      %p44 = scmp.le.s32.totalorder 1, %s3
      %p45 = scmp.lt.s32.totalorder %s3, 5
      %p46 = pnand %p44, %p45
      %p47 = pneg %p46
      // Predicated region
      $region9: #{custom-call.29} parent=5 // pred_check
        _
      $region10: #{custom-call.29} parent=5 // pred_check_branch
        %49 = sbr.rel (%p46) target = $region12
      $region11: #{custom-call.29} parent=5 // pred_region
        %s50 = ssub.s32 %s3, 1
      $region12: #{custom-call.29} parent=5 // pred_fallthru
        _
      %p51 = scmp.lt.s32.totalorder %s3, 4
      // Predicated region
      $region13: #{custom-call.29} parent=5 // pred_check
        %p52 = pneg %p51
      $region14: #{custom-call.29} parent=5 // pred_check_branch
        %54 = sbr.rel (%p52) target = $region16
      $region15: #{custom-call.29} parent=5 // pred_region
        %s55 = sand.u32 %s3, 1
        %s56 = sand.u32 %s3, 1
        %s57 = smul.addr %s56, 4
        %s58 = scalar_lea.vmem [#allocation1], %s57
        %s59 = sadd.s32 %s14, %s13
        %s60 = sadd.s32 %s59, %s12
        %s61 = sadd.s32 %s60, %s11
        %s62 = smul.addr %s10, 2
        %s63 = sadd.s32 %s61, %s62
        %s64 = smul.addr %s63, 4
        %s65 = scalar_lea.vmem %s0, %s64
        // Predicated region
        $region17: #{custom-call.29} parent=15 // pred_check
          _
        $region18: #{custom-call.29} parent=15 // pred_check_branch
          %67 = sbr.rel (0) target = $region20
        $region19: #{custom-call.29} parent=15 // pred_region
          // Predicated region
          $region21: #{custom-call.29} parent=19 // pred_check
            _
          $region22: #{custom-call.29} parent=19 // pred_check_branch
            %69 = sbr.rel target = $region24
          $region23: #{custom-call.29} parent=19 // pred_region
            // Predicated region
            $region36: #{custom-call.29} parent=23 // pred_check
              _
            $region37: #{custom-call.29} parent=23 // pred_check_branch
              %84 = sbr.rel (0) target = $region39
            $region38: #{custom-call.29} parent=23 // pred_region
              loop: start=0, step=1, limit=1
              $region40: #{custom-call.29} parent=38 // loop_pre_header
                _
              $region41: #{custom-call.29} parent=38 // loop_header
                %s87 = sphi 0, %s91
                %p88 = scmp.ge.s32.totalorder %s87, 1
                %s92 = sphi %s65, %s65
                %s93 = sphi %s58, %s58
              $region42: #{custom-call.29} parent=38 // loop_header_branch
                %90 = sbr.rel (%p88) target = $region46
              $region43: #{custom-call.29} parent=38 // loop_body
                %v94 = vld [vmem:[%s92] sm:$0xf]
                %95 = vst [vmem:[%s93] sm:$0xf] %v94
              $region44: #{custom-call.29} parent=38 // loop_footer
                %s91 = sadd.s32 1, %s87
              $region45: #{custom-call.29} parent=38 // loop_footer_branch
                %86 = sbr.rel target = $region41
              $region46: #{custom-call.29} parent=38 // loop_exit
                _
            $region39: #{custom-call.29} parent=23 // pred_fallthru
              _
          $region24: #{custom-call.29} parent=19 // pred_fallthru
            _
          // Predicated region
          $region25: #{custom-call.29} parent=19 // pred_check
            _
          $region26: #{custom-call.29} parent=19 // pred_check_branch
            %71 = sbr.rel (0) target = $region28
          $region27: #{custom-call.29} parent=19 // pred_region
            loop: start=0, step=1, limit=1
            $region29: #{custom-call.29} parent=27 // loop_pre_header
              _
            $region30: #{custom-call.29} parent=27 // loop_header
              %s74 = sphi 0, %s78
              %p75 = scmp.ge.s32.totalorder %s74, 1
              %s79 = sphi %s65, %s65
              %s80 = sphi %s58, %s58
            $region31: #{custom-call.29} parent=27 // loop_header_branch
              %77 = sbr.rel (%p75) target = $region35
            $region32: #{custom-call.29} parent=27 // loop_body
              %v81 = vld [vmem:[%s79] sm:$0xf]
              %82 = vst [vmem:[%s80] sm:$0xf] %v81
            $region33: #{custom-call.29} parent=27 // loop_footer
              %s78 = sadd.s32 1, %s74
            $region34: #{custom-call.29} parent=27 // loop_footer_branch
              %73 = sbr.rel target = $region30
            $region35: #{custom-call.29} parent=27 // loop_exit
              _
          $region28: #{custom-call.29} parent=19 // pred_fallthru
            _
        $region20: #{custom-call.29} parent=15 // pred_fallthru
          _
        %96 = vnop
      $region16: #{custom-call.29} parent=5 // pred_fallthru
        _
      %p97 = scmp.le.s32.totalorder 1, %s3
      %p98 = scmp.lt.s32.totalorder %s3, 5
      %p99 = pnand %p97, %p98
      %p100 = pneg %p99
      // Predicated region
      $region47: #{custom-call.29} parent=5 // pred_check
        _
      $region48: #{custom-call.29} parent=5 // pred_check_branch
        %102 = sbr.rel (%p99) target = $region50
      $region49: #{custom-call.29} parent=5 // pred_region
        #allocation4 [shape = 'f32[3,3]{1,0}', space=vmem, size = 0x1000, scoped, tag = 'rescaled input a']
        %s103 = ssub.s32 %s3, 1
        %s104 = sand.u32 %s8, 1
        %s105 = sand.u32 %s8, 1
        %s106 = smul.addr %s105, 4
        %s107 = scalar_lea.vmem [#allocation1], %s106
        %s108 = sand.u32 %s8, 1
        %s109 = sand.u32 %s8, 1
        %s110 = smul.addr %s109, 4
        %s111 = scalar_lea.vmem [#allocation1], %s110
        %s112 = sand.u32 %s8, 1
        %s113 = sand.u32 %s8, 1
        %s114 = smul.addr %s113, 4
        %s115 = scalar_lea.vmem [#allocation3], %s114
        %s117 = sshllo.u32 0, 4
        %v118 = vld [vmem:[%s111] sm:%s117]
        %119 = vst [vmem:[#allocation0] sm:%s117] %v118
        %v120 = vlaneseq
        %v121 = vand.u32 %v120, 127
        %vm122 = vcmp.lt.s32.totalorder %v121, 3
        %v123 = vlaneseq
        %v124 = vshrl.u32 %v123, 7
        %vm126 = vcmp.eq.s32.totalorder %v124, %v121
        %v127 = vld [vmem:[#allocation0] sm:$0xff]
        %v128 = vsel %vm126, %v127, 0.0
        %129 = vadd.xlane.f32.xlu0 %v128
        %v130 = vpop.xlane.xlu0 %129
        %vm131 = vcmp.ge.s32.totalorder %v124, %v121
        %vm132 = vmand %vm131, %vm122
        %v133 = vsel %vm132, %v127, 0.0
        %v134 = vrcp.pop %v130
        %v135 = vmul.f32 %v133, %v134
        %136 = vst [vmem:[#allocation4] sm:$0xff] %v135
        %v137 = vlaneseq
        %v138 = vand.u32 %v137, 127
        %v139 = vlaneseq
        %v140 = vshrl.u32 %v139, 7
        %vm142 = vcmp.eq.s32.totalorder %v138, %v140
        %v143 = vlaneseq
        %v144 = vand.u32 %v143, 127
        %vm145 = vcmp.eq.s32.totalorder %v144, 0
        %v146 = vsel %vm145, 1.0, -1.0
        %v147 = vsel %vm142, %v146, 0.0
        %s148 = scalar_lea.vmem [#allocation4], 1
        %v149 = vld [vmem:[%s148] ss:$0 sm:$0xff]
        %v150 = vxor.u32 %v149, 2147483648
        %v151 = vlaneseq
        %v152 = vand.u32 %v151, 127
        %vm153 = vcmp.eq.s32.totalorder %v152, 1
        %v154 = vmul.f32 %v150, %v147
        %155 = vadd.xlane.f32.xlu0 %v154
        %v156 = vpop.xlane.xlu0 %155
        %v157 = vsel %vm153, %v156, %v147
        %s158 = scalar_lea.vmem [#allocation4], 2
        %v159 = vld [vmem:[%s158] ss:$0 sm:$0xff]
        %v160 = vxor.u32 %v159, 2147483648
        %v161 = vlaneseq
        %v162 = vand.u32 %v161, 127
        %vm163 = vcmp.eq.s32.totalorder %v162, 2
        %v164 = vmul.f32 %v160, %v157
        %165 = vadd.xlane.f32.xlu0 %v164
        %v166 = vpop.xlane.xlu0 %165
        %v167 = vsel %vm163, %v166, %v157
        %v168 = vrcp.pop %v130
        %v169 = vmul.f32 %v167, %v168
        %vm170 = vweird.f32 %v130
        %v171 = vsel %vm170, %v167, %v169
        %172 = vst [vmem:[#allocation2] sm:$0xff] %v171
        %s174 = sshllo.u32 0, 4
        %v176 = vld [vmem:[#allocation2] sm:%s174]
        %s177 = sshllo.u32 0, 4
        %178 = vst [vmem:[%s115] sm:%s177] %v176
        %s179 = sand.u32 %s8, 1
        %s180 = sand.u32 %s8, 1
        %s181 = smul.addr %s180, 4
        %s182 = scalar_lea.vmem [#allocation3], %s181
        %s183 = sadd.s32 %s19, %s18
        %s184 = sadd.s32 %s183, %s17
        %s185 = sadd.s32 %s184, %s16
        %s186 = smul.addr %s15, 2
        %s187 = sadd.s32 %s185, %s186
        %s188 = smul.addr %s187, 4
        %s189 = scalar_lea.vmem %s1, %s188
        // Predicated region
        $region51: #{custom-call.29} parent=49 // pred_check
          _
        $region52: #{custom-call.29} parent=49 // pred_check_branch
          %191 = sbr.rel (0) target = $region54
        $region53: #{custom-call.29} parent=49 // pred_region
          // Predicated region
          $region55: #{custom-call.29} parent=53 // pred_check
            _
          $region56: #{custom-call.29} parent=53 // pred_check_branch
            %193 = sbr.rel target = $region58
          $region57: #{custom-call.29} parent=53 // pred_region
            // Predicated region
            $region70: #{custom-call.29} parent=57 // pred_check
              _
            $region71: #{custom-call.29} parent=57 // pred_check_branch
              %208 = sbr.rel (0) target = $region73
            $region72: #{custom-call.29} parent=57 // pred_region
              loop: start=0, step=1, limit=1
              $region74: #{custom-call.29} parent=72 // loop_pre_header
                _
              $region75: #{custom-call.29} parent=72 // loop_header
                %s211 = sphi 0, %s215
                %p212 = scmp.ge.s32.totalorder %s211, 1
                %s216 = sphi %s182, %s182
                %s217 = sphi %s189, %s189
              $region76: #{custom-call.29} parent=72 // loop_header_branch
                %214 = sbr.rel (%p212) target = $region80
              $region77: #{custom-call.29} parent=72 // loop_body
                %v218 = vld [vmem:[%s216] sm:$0xf]
                %219 = vst [vmem:[%s217] sm:$0xf] %v218
              $region78: #{custom-call.29} parent=72 // loop_footer
                %s215 = sadd.s32 1, %s211
              $region79: #{custom-call.29} parent=72 // loop_footer_branch
                %210 = sbr.rel target = $region75
              $region80: #{custom-call.29} parent=72 // loop_exit
                _
            $region73: #{custom-call.29} parent=57 // pred_fallthru
              _
          $region58: #{custom-call.29} parent=53 // pred_fallthru
            _
          // Predicated region
          $region59: #{custom-call.29} parent=53 // pred_check
            _
          $region60: #{custom-call.29} parent=53 // pred_check_branch
            %195 = sbr.rel (0) target = $region62
          $region61: #{custom-call.29} parent=53 // pred_region
            loop: start=0, step=1, limit=1
            $region63: #{custom-call.29} parent=61 // loop_pre_header
              _
            $region64: #{custom-call.29} parent=61 // loop_header
              %s198 = sphi 0, %s202
              %p199 = scmp.ge.s32.totalorder %s198, 1
              %s203 = sphi %s182, %s182
              %s204 = sphi %s189, %s189
            $region65: #{custom-call.29} parent=61 // loop_header_branch
              %201 = sbr.rel (%p199) target = $region69
            $region66: #{custom-call.29} parent=61 // loop_body
              %v205 = vld [vmem:[%s203] sm:$0xf]
              %206 = vst [vmem:[%s204] sm:$0xf] %v205
            $region67: #{custom-call.29} parent=61 // loop_footer
              %s202 = sadd.s32 1, %s198
            $region68: #{custom-call.29} parent=61 // loop_footer_branch
              %197 = sbr.rel target = $region64
            $region69: #{custom-call.29} parent=61 // loop_exit
              _
          $region62: #{custom-call.29} parent=53 // pred_fallthru
            _
        $region54: #{custom-call.29} parent=49 // pred_fallthru
          _
        %220 = vnop
      $region50: #{custom-call.29} parent=5 // pred_fallthru
        _
      %p221 = scmp.le.s32.totalorder 2, %s3
      // Predicated region
      $region81: #{custom-call.29} parent=5 // pred_check
        %p222 = pneg %p221
      $region82: #{custom-call.29} parent=5 // pred_check_branch
        %224 = sbr.rel (%p222) target = $region84
      $region83: #{custom-call.29} parent=5 // pred_region
        %s225 = ssub.s32 %s3, 2
        %s226 = sand.u32 %s9, 1
        %s227 = sand.u32 %s9, 1
        %s228 = smul.addr %s227, 4
        %s229 = scalar_lea.vmem [#allocation3], %s228
      $region84: #{custom-call.29} parent=5 // pred_fallthru
        _
    $region6: #{custom-call.29} parent=1 // loop_footer
      %s7 = sadd.s32 1, %s3
    $region7: #{custom-call.29} parent=1 // loop_footer_branch
      %2 = sbr.rel target = $region3
    $region8: #{custom-call.29} parent=1 // loop_exit
      _

// kernel: custom-call.28
$region0: #{custom-call.28}
  %s0 = inlined_call_operand.vmem [shape: f32[2,2,1,3,3], index: 0, kind: input, shape index: {}]
  %s1 = inlined_call_operand.vmem [shape: f32[2,2,1,3,3], index: 1, kind: output, shape index: {}]
  $region1: #{custom-call.28} parent=0
    #allocation0 [shape = 'u8[4096]{0}', space=vmem, size = 0x1000, scoped, tag = 'operand span for operand 0']
    #allocation1 [shape = 'u8[4096]{0}', space=vmem, size = 0x1000, scoped, tag = 'packed  for operand 0']
    #allocation2 [shape = 'u8[4096]{0}', space=vmem, size = 0x1000, scoped, tag = 'operand span for operand 1']
    #allocation3 [shape = 'u8[4096]{0}', space=vmem, size = 0x1000, scoped, tag = 'packed  for operand 1']
    loop: start=0, step=1, limit=6
    $region2: #{custom-call.28} parent=1 // loop_pre_header
      _
    $region3: #{custom-call.28} parent=1 // loop_header
      %s3 = sphi 0, %s7
      %p4 = scmp.ge.s32.totalorder %s3, 6
      %s10 = sphi 0, %s43
      %s11 = sphi 0, %s39
      %s12 = sphi 0, %s35
      %s13 = sphi 0, %s31
      %s14 = sphi 0, %s27
      %s15 = sphi 0, %s10
      %s16 = sphi 0, %s11
      %s17 = sphi 0, %s12
      %s18 = sphi 0, %s13
      %s19 = sphi 0, %s14
      %s20 = sphi 0, %s15
      %s21 = sphi 0, %s16
      %s22 = sphi 0, %s17
      %s23 = sphi 0, %s18
      %s24 = sphi 0, %s19
    $region4: #{custom-call.28} parent=1 // loop_header_branch
      %6 = sbr.rel (%p4) target = $region8
    $region5: #{custom-call.28} parent=1 // loop_body
      %s8 = ssub.s32 %s3, 1
      %s9 = ssub.s32 %s3, 2
      %s25 = sadd.s32 1, %s14
      %p26 = scmp.ge.s32.totalorder %s25, 1
      %s27 = scalar_select %p26, 0, %s25
      %s28 = sadd.s32 1, %s13
      %s29 = scalar_select %p26, %s28, %s13
      %p30 = scmp.ge.s32.totalorder %s29, 1
      %s31 = scalar_select %p30, 0, %s29
      %s32 = sadd.s32 1, %s12
      %s33 = scalar_select %p30, %s32, %s12
      %p34 = scmp.ge.s32.totalorder %s33, 1
      %s35 = scalar_select %p34, 0, %s33
      %s36 = sadd.s32 1, %s11
      %s37 = scalar_select %p34, %s36, %s11
      %p38 = scmp.ge.s32.totalorder %s37, 2
      %s39 = scalar_select %p38, 0, %s37
      %s40 = sadd.s32 1, %s10
      %s41 = scalar_select %p38, %s40, %s10
      %p42 = scmp.ge.s32.totalorder %s41, 2
      %s43 = scalar_select %p42, 0, %s41
      %p44 = scmp.le.s32.totalorder 1, %s3
      %p45 = scmp.lt.s32.totalorder %s3, 5
      %p46 = pnand %p44, %p45
      %p47 = pneg %p46
      // Predicated region
      $region9: #{custom-call.28} parent=5 // pred_check
        _
      $region10: #{custom-call.28} parent=5 // pred_check_branch
        %49 = sbr.rel (%p46) target = $region12
      $region11: #{custom-call.28} parent=5 // pred_region
        %s50 = ssub.s32 %s3, 1
      $region12: #{custom-call.28} parent=5 // pred_fallthru
        _
      %p51 = scmp.lt.s32.totalorder %s3, 4
      // Predicated region
      $region13: #{custom-call.28} parent=5 // pred_check
        %p52 = pneg %p51
      $region14: #{custom-call.28} parent=5 // pred_check_branch
        %54 = sbr.rel (%p52) target = $region16
      $region15: #{custom-call.28} parent=5 // pred_region
        %s55 = sand.u32 %s3, 1
        %s56 = sand.u32 %s3, 1
        %s57 = smul.addr %s56, 4
        %s58 = scalar_lea.vmem [#allocation1], %s57
        %s59 = sadd.s32 %s14, %s13
        %s60 = sadd.s32 %s59, %s12
        %s61 = sadd.s32 %s60, %s11
        %s62 = smul.addr %s10, 2
        %s63 = sadd.s32 %s61, %s62
        %s64 = smul.addr %s63, 4
        %s65 = scalar_lea.vmem %s0, %s64
        // Predicated region
        $region17: #{custom-call.28} parent=15 // pred_check
          _
        $region18: #{custom-call.28} parent=15 // pred_check_branch
          %67 = sbr.rel (0) target = $region20
        $region19: #{custom-call.28} parent=15 // pred_region
          // Predicated region
          $region21: #{custom-call.28} parent=19 // pred_check
            _
          $region22: #{custom-call.28} parent=19 // pred_check_branch
            %69 = sbr.rel target = $region24
          $region23: #{custom-call.28} parent=19 // pred_region
            // Predicated region
            $region36: #{custom-call.28} parent=23 // pred_check
              _
            $region37: #{custom-call.28} parent=23 // pred_check_branch
              %84 = sbr.rel (0) target = $region39
            $region38: #{custom-call.28} parent=23 // pred_region
              loop: start=0, step=1, limit=1
              $region40: #{custom-call.28} parent=38 // loop_pre_header
                _
              $region41: #{custom-call.28} parent=38 // loop_header
                %s87 = sphi 0, %s91
                %p88 = scmp.ge.s32.totalorder %s87, 1
                %s92 = sphi %s65, %s65
                %s93 = sphi %s58, %s58
              $region42: #{custom-call.28} parent=38 // loop_header_branch
                %90 = sbr.rel (%p88) target = $region46
              $region43: #{custom-call.28} parent=38 // loop_body
                %v94 = vld [vmem:[%s92] sm:$0xf]
                %95 = vst [vmem:[%s93] sm:$0xf] %v94
              $region44: #{custom-call.28} parent=38 // loop_footer
                %s91 = sadd.s32 1, %s87
              $region45: #{custom-call.28} parent=38 // loop_footer_branch
                %86 = sbr.rel target = $region41
              $region46: #{custom-call.28} parent=38 // loop_exit
                _
            $region39: #{custom-call.28} parent=23 // pred_fallthru
              _
          $region24: #{custom-call.28} parent=19 // pred_fallthru
            _
          // Predicated region
          $region25: #{custom-call.28} parent=19 // pred_check
            _
          $region26: #{custom-call.28} parent=19 // pred_check_branch
            %71 = sbr.rel (0) target = $region28
          $region27: #{custom-call.28} parent=19 // pred_region
            loop: start=0, step=1, limit=1
            $region29: #{custom-call.28} parent=27 // loop_pre_header
              _
            $region30: #{custom-call.28} parent=27 // loop_header
              %s74 = sphi 0, %s78
              %p75 = scmp.ge.s32.totalorder %s74, 1
              %s79 = sphi %s65, %s65
              %s80 = sphi %s58, %s58
            $region31: #{custom-call.28} parent=27 // loop_header_branch
              %77 = sbr.rel (%p75) target = $region35
            $region32: #{custom-call.28} parent=27 // loop_body
              %v81 = vld [vmem:[%s79] sm:$0xf]
              %82 = vst [vmem:[%s80] sm:$0xf] %v81
            $region33: #{custom-call.28} parent=27 // loop_footer
              %s78 = sadd.s32 1, %s74
            $region34: #{custom-call.28} parent=27 // loop_footer_branch
              %73 = sbr.rel target = $region30
            $region35: #{custom-call.28} parent=27 // loop_exit
              _
          $region28: #{custom-call.28} parent=19 // pred_fallthru
            _
        $region20: #{custom-call.28} parent=15 // pred_fallthru
          _
        %96 = vnop
      $region16: #{custom-call.28} parent=5 // pred_fallthru
        _
      %p97 = scmp.le.s32.totalorder 1, %s3
      %p98 = scmp.lt.s32.totalorder %s3, 5
      %p99 = pnand %p97, %p98
      %p100 = pneg %p99
      // Predicated region
      $region47: #{custom-call.28} parent=5 // pred_check
        _
      $region48: #{custom-call.28} parent=5 // pred_check_branch
        %102 = sbr.rel (%p99) target = $region50
      $region49: #{custom-call.28} parent=5 // pred_region
        #allocation4 [shape = 'f32[3,3]{1,0}', space=vmem, size = 0x1000, scoped, tag = 'rescaled input a']
        %s103 = ssub.s32 %s3, 1
        %s104 = sand.u32 %s8, 1
        %s105 = sand.u32 %s8, 1
        %s106 = smul.addr %s105, 4
        %s107 = scalar_lea.vmem [#allocation1], %s106
        %s108 = sand.u32 %s8, 1
        %s109 = sand.u32 %s8, 1
        %s110 = smul.addr %s109, 4
        %s111 = scalar_lea.vmem [#allocation1], %s110
        %s112 = sand.u32 %s8, 1
        %s113 = sand.u32 %s8, 1
        %s114 = smul.addr %s113, 4
        %s115 = scalar_lea.vmem [#allocation3], %s114
        %s117 = sshllo.u32 0, 4
        %v118 = vld [vmem:[%s111] sm:%s117]
        %119 = vst [vmem:[#allocation0] sm:%s117] %v118
        %v120 = vlaneseq
        %v121 = vand.u32 %v120, 127
        %vm122 = vcmp.lt.s32.totalorder %v121, 3
        %v123 = vlaneseq
        %v124 = vshrl.u32 %v123, 7
        %vm126 = vcmp.eq.s32.totalorder %v124, %v121
        %v127 = vld [vmem:[#allocation0] sm:$0xff]
        %v128 = vsel %vm126, %v127, 0.0
        %129 = vadd.xlane.f32.xlu0 %v128
        %v130 = vpop.xlane.xlu0 %129
        %vm131 = vcmp.le.s32.totalorder %v124, %v121
        %vm132 = vmand %vm131, %vm122
        %v133 = vsel %vm132, %v127, 0.0
        %v134 = vrcp.pop %v130
        %v135 = vmul.f32 %v133, %v134
        %136 = vst [vmem:[#allocation4] sm:$0xff] %v135
        %v137 = vlaneseq
        %v138 = vand.u32 %v137, 127
        %v139 = vlaneseq
        %v140 = vshrl.u32 %v139, 7
        %vm142 = vcmp.eq.s32.totalorder %v138, %v140
        %v143 = vlaneseq
        %v144 = vand.u32 %v143, 127
        %vm145 = vcmp.eq.s32.totalorder %v144, 2
        %v146 = vsel %vm145, 1.0, -1.0
        %v147 = vsel %vm142, %v146, 0.0
        %s148 = scalar_lea.vmem [#allocation4], 1
        %v149 = vld [vmem:[%s148] ss:$0 sm:$0xff]
        %v150 = vxor.u32 %v149, 2147483648
        %v151 = vlaneseq
        %v152 = vand.u32 %v151, 127
        %vm153 = vcmp.eq.s32.totalorder %v152, 1
        %v154 = vmul.f32 %v150, %v147
        %155 = vadd.xlane.f32.xlu0 %v154
        %v156 = vpop.xlane.xlu0 %155
        %v157 = vsel %vm153, %v156, %v147
        %v158 = vld [vmem:[#allocation4] ss:$0 sm:$0xff]
        %v159 = vxor.u32 %v158, 2147483648
        %v160 = vlaneseq
        %v161 = vand.u32 %v160, 127
        %vm162 = vcmp.eq.s32.totalorder %v161, 0
        %v163 = vmul.f32 %v159, %v157
        %164 = vadd.xlane.f32.xlu0 %v163
        %v165 = vpop.xlane.xlu0 %164
        %v166 = vsel %vm162, %v165, %v157
        %v167 = vrcp.pop %v130
        %v168 = vmul.f32 %v166, %v167
        %vm169 = vweird.f32 %v130
        %v170 = vsel %vm169, %v166, %v168
        %171 = vst [vmem:[#allocation2] sm:$0xff] %v170
        %s173 = sshllo.u32 0, 4
        %v175 = vld [vmem:[#allocation2] sm:%s173]
        %s176 = sshllo.u32 0, 4
        %177 = vst [vmem:[%s115] sm:%s176] %v175
        %s178 = sand.u32 %s8, 1
        %s179 = sand.u32 %s8, 1
        %s180 = smul.addr %s179, 4
        %s181 = scalar_lea.vmem [#allocation3], %s180
        %s182 = sadd.s32 %s19, %s18
        %s183 = sadd.s32 %s182, %s17
        %s184 = sadd.s32 %s183, %s16
        %s185 = smul.addr %s15, 2
        %s186 = sadd.s32 %s184, %s185
        %s187 = smul.addr %s186, 4
        %s188 = scalar_lea.vmem %s1, %s187
        // Predicated region
        $region51: #{custom-call.28} parent=49 // pred_check
          _
        $region52: #{custom-call.28} parent=49 // pred_check_branch
          %190 = sbr.rel (0) target = $region54
        $region53: #{custom-call.28} parent=49 // pred_region
          // Predicated region
          $region55: #{custom-call.28} parent=53 // pred_check
            _
          $region56: #{custom-call.28} parent=53 // pred_check_branch
            %192 = sbr.rel target = $region58
          $region57: #{custom-call.28} parent=53 // pred_region
            // Predicated region
            $region70: #{custom-call.28} parent=57 // pred_check
              _
            $region71: #{custom-call.28} parent=57 // pred_check_branch
              %207 = sbr.rel (0) target = $region73
            $region72: #{custom-call.28} parent=57 // pred_region
              loop: start=0, step=1, limit=1
              $region74: #{custom-call.28} parent=72 // loop_pre_header
                _
              $region75: #{custom-call.28} parent=72 // loop_header
                %s210 = sphi 0, %s214
                %p211 = scmp.ge.s32.totalorder %s210, 1
                %s215 = sphi %s181, %s181
                %s216 = sphi %s188, %s188
              $region76: #{custom-call.28} parent=72 // loop_header_branch
                %213 = sbr.rel (%p211) target = $region80
              $region77: #{custom-call.28} parent=72 // loop_body
                %v217 = vld [vmem:[%s215] sm:$0xf]
                %218 = vst [vmem:[%s216] sm:$0xf] %v217
              $region78: #{custom-call.28} parent=72 // loop_footer
                %s214 = sadd.s32 1, %s210
              $region79: #{custom-call.28} parent=72 // loop_footer_branch
                %209 = sbr.rel target = $region75
              $region80: #{custom-call.28} parent=72 // loop_exit
                _
            $region73: #{custom-call.28} parent=57 // pred_fallthru
              _
          $region58: #{custom-call.28} parent=53 // pred_fallthru
            _
          // Predicated region
          $region59: #{custom-call.28} parent=53 // pred_check
            _
          $region60: #{custom-call.28} parent=53 // pred_check_branch
            %194 = sbr.rel (0) target = $region62
          $region61: #{custom-call.28} parent=53 // pred_region
            loop: start=0, step=1, limit=1
            $region63: #{custom-call.28} parent=61 // loop_pre_header
              _
            $region64: #{custom-call.28} parent=61 // loop_header
              %s197 = sphi 0, %s201
              %p198 = scmp.ge.s32.totalorder %s197, 1
              %s202 = sphi %s181, %s181
              %s203 = sphi %s188, %s188
            $region65: #{custom-call.28} parent=61 // loop_header_branch
              %200 = sbr.rel (%p198) target = $region69
            $region66: #{custom-call.28} parent=61 // loop_body
              %v204 = vld [vmem:[%s202] sm:$0xf]
              %205 = vst [vmem:[%s203] sm:$0xf] %v204
            $region67: #{custom-call.28} parent=61 // loop_footer
              %s201 = sadd.s32 1, %s197
            $region68: #{custom-call.28} parent=61 // loop_footer_branch
              %196 = sbr.rel target = $region64
            $region69: #{custom-call.28} parent=61 // loop_exit
              _
          $region62: #{custom-call.28} parent=53 // pred_fallthru
            _
        $region54: #{custom-call.28} parent=49 // pred_fallthru
          _
        %219 = vnop
      $region50: #{custom-call.28} parent=5 // pred_fallthru
        _
      %p220 = scmp.le.s32.totalorder 2, %s3
      // Predicated region
      $region81: #{custom-call.28} parent=5 // pred_check
        %p221 = pneg %p220
      $region82: #{custom-call.28} parent=5 // pred_check_branch
        %223 = sbr.rel (%p221) target = $region84
      $region83: #{custom-call.28} parent=5 // pred_region
        %s224 = ssub.s32 %s3, 2
        %s225 = sand.u32 %s9, 1
        %s226 = sand.u32 %s9, 1
        %s227 = smul.addr %s226, 4
        %s228 = scalar_lea.vmem [#allocation3], %s227
      $region84: #{custom-call.28} parent=5 // pred_fallthru
        _
    $region6: #{custom-call.28} parent=1 // loop_footer
      %s7 = sadd.s32 1, %s3
    $region7: #{custom-call.28} parent=1 // loop_footer_branch
      %2 = sbr.rel target = $region3
    $region8: #{custom-call.28} parent=1 // loop_exit
      _

// kernel: base_transform_forward.1
$region0: #{base_transform_forward.1}
  #allocation0 [shape = 'u32[]', space=smem, size = 0x4, offset = 0x4, fixed_abs, tag = 'smem constant byte address 0x4 - core index']
  #allocation1 [shape = 'u32[144,128]{1,0:T(1,128)}', space=vmem, size = 0x12000, scoped, tag = 'internal scratch']
  %s0 = inlined_call_operand.vmem [shape: f32[4,9], index: 0, kind: input, shape index: {}]
  %s1 = inlined_call_operand.vmem [shape: f32[4,9], index: 1, kind: input, shape index: {}]
  %s2 = inlined_call_operand.vmem [shape: f32[4,3], index: 2, kind: input, shape index: {}]
  %s3 = inlined_call_operand.vmem [shape: f32[4,3], index: 3, kind: input, shape index: {}]
  %s4 = inlined_call_operand.vmem [shape: f32[3,128], index: 4, kind: input, shape index: {}]
  %s5 = inlined_call_operand.vmem [shape: f32[2,4,64], index: 5, kind: input, shape index: {}]
  %s6 = inlined_call_operand.vmem [shape: f32[8,4], index: 6, kind: input, shape index: {}]
  %s7 = inlined_call_operand.vmem [shape: f32[8,1], index: 7, kind: input, shape index: {}]
  %s8 = inlined_call_operand.vmem [shape: f32[2,8,256], index: 8, kind: output, shape index: {0}]
  %s9 = inlined_call_operand.vmem [shape: f32[2,2,2,3,128], index: 9, kind: output, shape index: {1}]
  %10 = xla_tuple %s8, %s9
  %s11 = sld [smem:[#allocation0]]
  $region89: #{base_transform_forward.1} parent=0
    _
  %s13 = ssub.s32 1, %s11
  %s14 = scalar_select 0, %s13, %s11
  $region1: #{base_transform_forward.1} parent=0
    #allocation2 [shape = 'u8[2048]{0}', space=smem, size = 0x800, scoped, tag = 'input window, operand 0, single buffered']
    #allocation3 [shape = 's32[2]{0}', space=sflag, size = 0x8, scoped, tag = 'scoped memory for base_transform_forward.1']
    #allocation4 [shape = 'u8[2048]{0}', space=smem, size = 0x800, scoped, tag = 'input window, operand 1, single buffered']
    #allocation5 [shape = 's32[1]{0}', space=sflag, size = 0x4, scoped, tag = 'scoped memory for base_transform_forward.1']
    #allocation6 [shape = 'u8[2048]{0}', space=smem, size = 0x800, scoped, tag = 'input window, operand 2, single buffered']
    #allocation7 [shape = 'u8[2048]{0}', space=smem, size = 0x800, scoped, tag = 'input window, operand 3, single buffered']
    #allocation8 [shape = 's32[1]{0}', space=sflag, size = 0x4, scoped, tag = 'scoped memory for base_transform_forward.1']
    %15 = vsyncpa [#allocation3], 0
    %16 = vsyncpa [#allocation5], 0
    %17 = vsyncpa [#allocation8], 0
    loop: start=0, step=1, limit=6
    $region2: #{base_transform_forward.1} parent=1 // loop_pre_header
      _
    $region3: #{base_transform_forward.1} parent=1 // loop_header
      %s19 = sphi 0, %s23
      %p20 = scmp.ge.s32.totalorder %s19, 6
      %s26 = sphi 0, %s38
      %s27 = sphi 0, %s34
      %s28 = sphi 0, %s26
      %s29 = sphi 0, %s27
      %s30 = sphi 0, %s28
      %s31 = sphi 0, %s29
      %s39 = sphi 0, %s39
      %s41 = sphi 0, %s39
      %s42 = sphi 0, %s41
      %s56 = sphi 0, %s42
      %s60 = sphi 0, %s60
      %s62 = sphi 0, %s60
      %s63 = sphi 0, %s62
      %s77 = sphi 0, %s63
      %s81 = sphi 0, %s81
      %s83 = sphi 0, %s81
      %s84 = sphi 0, %s83
      %s98 = sphi 0, %s84
      %s102 = sphi 0, %s102
      %s104 = sphi 0, %s102
      %s105 = sphi 0, %s104
      %s119 = sphi 0, %s105
      %s123 = sphi 0, %s123
      %s125 = sphi 0, %s123
      %s126 = sphi 0, %s125
      %s140 = sphi 0, %s126
      %s146 = sphi 0, %s148
      %s149 = sphi 0, %s146
      %s150 = sphi 0, %s149
      %s166 = sphi 0, %s150
      %s170 = sphi 0, %s170
      %s172 = sphi 0, %s170
      %s173 = sphi 0, %s172
      %s187 = sphi 0, %s173
      %s191 = sphi 0, %s191
      %s193 = sphi 0, %s191
      %s194 = sphi 0, %s193
      %s208 = sphi 0, %s194
      %s216 = sphi 0, %s218
      %s219 = sphi 0, %s216
      %s220 = sphi 0, %s219
      %s236 = sphi 0, %s220
      %s244 = sphi 0, %s246
      %s247 = sphi 0, %s244
      %s248 = sphi 0, %s247
      %s264 = sphi 0, %s248
    $region4: #{base_transform_forward.1} parent=1 // loop_header_branch
      %22 = sbr.rel (%p20) target = $region8
    $region5: #{base_transform_forward.1} parent=1 // loop_body
      %s24 = ssub.s32 %s19, 1
      %s25 = ssub.s32 %s19, 2
      %s32 = sadd.s32 1, %s27
      %p33 = scmp.ge.s32.totalorder %s32, 2
      %s34 = scalar_select %p33, 0, %s32
      %s35 = sadd.s32 1, %s26
      %s36 = scalar_select %p33, %s35, %s26
      %p37 = scmp.ge.s32.totalorder %s36, 2
      %s38 = scalar_select %p37, 0, %s36
      %s40 = sadd.s32 %s39, 1
      %p43 = scmp.eq.s32.totalorder %s19, 3
      %p44 = scmp.ne.s32.totalorder %s39, %s41
      %p45 = scmp.eq.s32.totalorder %s19, 0
      %p46 = por %p44, %p45
      %p47 = scmp.ne.s32.totalorder %s39, %s41
      %p48 = scmp.eq.s32.totalorder %s24, 3
      %p49 = por %p47, %p48
      %p50 = scmp.ne.s32.totalorder %s41, %s42
      %p51 = scmp.eq.s32.totalorder %s24, 0
      %p52 = por %p50, %p51
      %p53 = scmp.ne.s32.totalorder %s41, %s42
      %p54 = scmp.eq.s32.totalorder %s25, 3
      %p55 = por %p53, %p54
      %p57 = scmp.ne.s32.totalorder %s42, %s56
      %p58 = scmp.eq.s32.totalorder %s25, 0
      %p59 = por %p57, %p58
      %s61 = sadd.s32 %s60, 1
      %p64 = scmp.eq.s32.totalorder %s19, 3
      %p65 = scmp.ne.s32.totalorder %s60, %s62
      %p66 = scmp.eq.s32.totalorder %s19, 0
      %p67 = por %p65, %p66
      %p68 = scmp.ne.s32.totalorder %s60, %s62
      %p69 = scmp.eq.s32.totalorder %s24, 3
      %p70 = por %p68, %p69
      %p71 = scmp.ne.s32.totalorder %s62, %s63
      %p72 = scmp.eq.s32.totalorder %s24, 0
      %p73 = por %p71, %p72
      %p74 = scmp.ne.s32.totalorder %s62, %s63
      %p75 = scmp.eq.s32.totalorder %s25, 3
      %p76 = por %p74, %p75
      %p78 = scmp.ne.s32.totalorder %s63, %s77
      %p79 = scmp.eq.s32.totalorder %s25, 0
      %p80 = por %p78, %p79
      %s82 = sadd.s32 %s81, 1
      %p85 = scmp.eq.s32.totalorder %s19, 3
      %p86 = scmp.ne.s32.totalorder %s81, %s83
      %p87 = scmp.eq.s32.totalorder %s19, 0
      %p88 = por %p86, %p87
      %p89 = scmp.ne.s32.totalorder %s81, %s83
      %p90 = scmp.eq.s32.totalorder %s24, 3
      %p91 = por %p89, %p90
      %p92 = scmp.ne.s32.totalorder %s83, %s84
      %p93 = scmp.eq.s32.totalorder %s24, 0
      %p94 = por %p92, %p93
      %p95 = scmp.ne.s32.totalorder %s83, %s84
      %p96 = scmp.eq.s32.totalorder %s25, 3
      %p97 = por %p95, %p96
      %p99 = scmp.ne.s32.totalorder %s84, %s98
      %p100 = scmp.eq.s32.totalorder %s25, 0
      %p101 = por %p99, %p100
      %s103 = sadd.s32 %s102, 1
      %p106 = scmp.eq.s32.totalorder %s19, 3
      %p107 = scmp.ne.s32.totalorder %s102, %s104
      %p108 = scmp.eq.s32.totalorder %s19, 0
      %p109 = por %p107, %p108
      %p110 = scmp.ne.s32.totalorder %s102, %s104
      %p111 = scmp.eq.s32.totalorder %s24, 3
      %p112 = por %p110, %p111
      %p113 = scmp.ne.s32.totalorder %s104, %s105
      %p114 = scmp.eq.s32.totalorder %s24, 0
      %p115 = por %p113, %p114
      %p116 = scmp.ne.s32.totalorder %s104, %s105
      %p117 = scmp.eq.s32.totalorder %s25, 3
      %p118 = por %p116, %p117
      %p120 = scmp.ne.s32.totalorder %s105, %s119
      %p121 = scmp.eq.s32.totalorder %s25, 0
      %p122 = por %p120, %p121
      %s124 = sadd.s32 %s123, 1
      %p127 = scmp.eq.s32.totalorder %s19, 3
      %p128 = scmp.ne.s32.totalorder %s123, %s125
      %p129 = scmp.eq.s32.totalorder %s19, 0
      %p130 = por %p128, %p129
      %p131 = scmp.ne.s32.totalorder %s123, %s125
      %p132 = scmp.eq.s32.totalorder %s24, 3
      %p133 = por %p131, %p132
      %p134 = scmp.ne.s32.totalorder %s125, %s126
      %p135 = scmp.eq.s32.totalorder %s24, 0
      %p136 = por %p134, %p135
      %p137 = scmp.ne.s32.totalorder %s125, %s126
      %p138 = scmp.eq.s32.totalorder %s25, 3
      %p139 = por %p137, %p138
      %p141 = scmp.ne.s32.totalorder %s126, %s140
      %p142 = scmp.eq.s32.totalorder %s25, 0
      %p143 = por %p141, %p142
      %s144 = ssub.s32 %s26, %s38
      %p145 = scmp.eq.s32.totalorder %s144, 0
      %s147 = sadd.s32 %s146, 1
      %s148 = scalar_select %p145, %s146, %s147
      %p151 = pneg %p145
      %p152 = scmp.eq.s32.totalorder %s19, 3
      %p153 = por %p151, %p152
      %p154 = scmp.ne.s32.totalorder %s146, %s149
      %p155 = scmp.eq.s32.totalorder %s19, 0
      %p156 = por %p154, %p155
      %p157 = scmp.ne.s32.totalorder %s146, %s149
      %p158 = scmp.eq.s32.totalorder %s24, 3
      %p159 = por %p157, %p158
      %p160 = scmp.ne.s32.totalorder %s149, %s150
      %p161 = scmp.eq.s32.totalorder %s24, 0
      %p162 = por %p160, %p161
      %p163 = scmp.ne.s32.totalorder %s149, %s150
      %p164 = scmp.eq.s32.totalorder %s25, 3
      %p165 = por %p163, %p164
      %p167 = scmp.ne.s32.totalorder %s150, %s166
      %p168 = scmp.eq.s32.totalorder %s25, 0
      %p169 = por %p167, %p168
      %s171 = sadd.s32 %s170, 1
      %p174 = scmp.eq.s32.totalorder %s19, 3
      %p175 = scmp.ne.s32.totalorder %s170, %s172
      %p176 = scmp.eq.s32.totalorder %s19, 0
      %p177 = por %p175, %p176
      %p178 = scmp.ne.s32.totalorder %s170, %s172
      %p179 = scmp.eq.s32.totalorder %s24, 3
      %p180 = por %p178, %p179
      %p181 = scmp.ne.s32.totalorder %s172, %s173
      %p182 = scmp.eq.s32.totalorder %s24, 0
      %p183 = por %p181, %p182
      %p184 = scmp.ne.s32.totalorder %s172, %s173
      %p185 = scmp.eq.s32.totalorder %s25, 3
      %p186 = por %p184, %p185
      %p188 = scmp.ne.s32.totalorder %s173, %s187
      %p189 = scmp.eq.s32.totalorder %s25, 0
      %p190 = por %p188, %p189
      %s192 = sadd.s32 %s191, 1
      %p195 = scmp.eq.s32.totalorder %s19, 3
      %p196 = scmp.ne.s32.totalorder %s191, %s193
      %p197 = scmp.eq.s32.totalorder %s19, 0
      %p198 = por %p196, %p197
      %p199 = scmp.ne.s32.totalorder %s191, %s193
      %p200 = scmp.eq.s32.totalorder %s24, 3
      %p201 = por %p199, %p200
      %p202 = scmp.ne.s32.totalorder %s193, %s194
      %p203 = scmp.eq.s32.totalorder %s24, 0
      %p204 = por %p202, %p203
      %p205 = scmp.ne.s32.totalorder %s193, %s194
      %p206 = scmp.eq.s32.totalorder %s25, 3
      %p207 = por %p205, %p206
      %p209 = scmp.ne.s32.totalorder %s194, %s208
      %p210 = scmp.eq.s32.totalorder %s25, 0
      %p211 = por %p209, %p210
      %s212 = ssub.s32 %s26, %s38
      %s213 = ssub.s32 %s27, %s34
      %s214 = sor.u32 %s212, %s213
      %p215 = scmp.eq.s32.totalorder %s214, 0
      %s217 = sadd.s32 %s216, 1
      %s218 = scalar_select %p215, %s216, %s217
      %p221 = pneg %p215
      %p222 = scmp.eq.s32.totalorder %s19, 3
      %p223 = por %p221, %p222
      %p224 = scmp.ne.s32.totalorder %s216, %s219
      %p225 = scmp.eq.s32.totalorder %s19, 0
      %p226 = por %p224, %p225
      %p227 = scmp.ne.s32.totalorder %s216, %s219
      %p228 = scmp.eq.s32.totalorder %s24, 3
      %p229 = por %p227, %p228
      %p230 = scmp.ne.s32.totalorder %s219, %s220
      %p231 = scmp.eq.s32.totalorder %s24, 0
      %p232 = por %p230, %p231
      %p233 = scmp.ne.s32.totalorder %s219, %s220
      %p234 = scmp.eq.s32.totalorder %s25, 3
      %p235 = por %p233, %p234
      %p237 = scmp.ne.s32.totalorder %s220, %s236
      %p238 = scmp.eq.s32.totalorder %s25, 0
      %p239 = por %p237, %p238
      %s240 = ssub.s32 %s26, %s38
      %s241 = ssub.s32 %s27, %s34
      %s242 = sor.u32 %s240, %s241
      %p243 = scmp.eq.s32.totalorder %s242, 0
      %s245 = sadd.s32 %s244, 1
      %s246 = scalar_select %p243, %s244, %s245
      %p249 = pneg %p243
      %p250 = scmp.eq.s32.totalorder %s19, 3
      %p251 = por %p249, %p250
      %p252 = scmp.ne.s32.totalorder %s244, %s247
      %p253 = scmp.eq.s32.totalorder %s19, 0
      %p254 = por %p252, %p253
      %p255 = scmp.ne.s32.totalorder %s244, %s247
      %p256 = scmp.eq.s32.totalorder %s24, 3
      %p257 = por %p255, %p256
      %p258 = scmp.ne.s32.totalorder %s247, %s248
      %p259 = scmp.eq.s32.totalorder %s24, 0
      %p260 = por %p258, %p259
      %p261 = scmp.ne.s32.totalorder %s247, %s248
      %p262 = scmp.eq.s32.totalorder %s25, 3
      %p263 = por %p261, %p262
      %p265 = scmp.ne.s32.totalorder %s248, %s264
      %p266 = scmp.eq.s32.totalorder %s25, 0
      %p267 = por %p265, %p266
      %p268 = scmp.le.s32.totalorder 1, %s19
      %p269 = scmp.lt.s32.totalorder %s19, 5
      %p270 = pnand %p268, %p269
      %p271 = pneg %p270
      // Predicated region
      $region9: #{base_transform_forward.1} parent=5 // pred_check
        _
      $region10: #{base_transform_forward.1} parent=5 // pred_check_branch
        %273 = sbr.rel (%p270) target = $region12
      $region11: #{base_transform_forward.1} parent=5 // pred_region
        %s274 = ssub.s32 %s19, 1
        // Predicated region
        $region13: #{base_transform_forward.1} parent=11 // pred_check
          %p275 = pneg %p52
        $region14: #{base_transform_forward.1} parent=11 // pred_check_branch
          %277 = sbr.rel (%p275) target = $region16
        $region15: #{base_transform_forward.1} parent=11 // pred_region
          %s279 = ssub.s32 64, 64
          %280 = vsyncadd [#allocation3], %s279
          %s282 = sshll.u32 %s0, 4
          %s283 = int_to_ptr.vmem [resolvable:$true] %s282
          %285 = dma.vmem_to_smem %s283, 64, [#allocation2], [#allocation3]
        $region16: #{base_transform_forward.1} parent=11 // pred_fallthru
          _
        // Predicated region
        $region17: #{base_transform_forward.1} parent=11 // pred_check
          %p286 = pneg %p73
        $region18: #{base_transform_forward.1} parent=11 // pred_check_branch
          %288 = sbr.rel (%p286) target = $region20
        $region19: #{base_transform_forward.1} parent=11 // pred_region
          %s290 = ssub.s32 64, 64
          %291 = vsyncadd [#allocation5], %s290
          %s293 = sshll.u32 %s1, 4
          %s294 = int_to_ptr.vmem [resolvable:$true] %s293
          %296 = dma.vmem_to_smem %s294, 64, [#allocation4], [#allocation5]
        $region20: #{base_transform_forward.1} parent=11 // pred_fallthru
          _
        // Predicated region
        $region21: #{base_transform_forward.1} parent=11 // pred_check
          %p297 = pneg %p94
        $region22: #{base_transform_forward.1} parent=11 // pred_check_branch
          %299 = sbr.rel (%p297) target = $region24
        $region23: #{base_transform_forward.1} parent=11 // pred_region
          %s301 = ssub.s32 64, 64
          %302 = vsyncadd [#allocation5], %s301
          %s304 = sshll.u32 %s2, 4
          %s305 = int_to_ptr.vmem [resolvable:$true] %s304
          %307 = dma.vmem_to_smem %s305, 64, [#allocation6], [#allocation5]
        $region24: #{base_transform_forward.1} parent=11 // pred_fallthru
          _
        // Predicated region
        $region25: #{base_transform_forward.1} parent=11 // pred_check
          %p308 = pneg %p115
        $region26: #{base_transform_forward.1} parent=11 // pred_check_branch
          %310 = sbr.rel (%p308) target = $region28
        $region27: #{base_transform_forward.1} parent=11 // pred_region
          %s312 = ssub.s32 64, 64
          %313 = vsyncadd [#allocation8], %s312
          %s315 = sshll.u32 %s3, 4
          %s316 = int_to_ptr.vmem [resolvable:$true] %s315
          %318 = dma.vmem_to_smem %s316, 64, [#allocation7], [#allocation8]
        $region28: #{base_transform_forward.1} parent=11 // pred_fallthru
          _
        // Predicated region
        $region29: #{base_transform_forward.1} parent=11 // pred_check
          %p319 = pneg %p136
        $region30: #{base_transform_forward.1} parent=11 // pred_check_branch
          %321 = sbr.rel (%p319) target = $region32
        $region31: #{base_transform_forward.1} parent=11 // pred_region
          _
        $region32: #{base_transform_forward.1} parent=11 // pred_fallthru
          _
        // Predicated region
        $region33: #{base_transform_forward.1} parent=11 // pred_check
          %p322 = pneg %p183
        $region34: #{base_transform_forward.1} parent=11 // pred_check_branch
          %324 = sbr.rel (%p322) target = $region36
        $region35: #{base_transform_forward.1} parent=11 // pred_region
          _
        $region36: #{base_transform_forward.1} parent=11 // pred_fallthru
          _
        // Predicated region
        $region37: #{base_transform_forward.1} parent=11 // pred_check
          %p325 = pneg %p204
        $region38: #{base_transform_forward.1} parent=11 // pred_check_branch
          %327 = sbr.rel (%p325) target = $region40
        $region39: #{base_transform_forward.1} parent=11 // pred_region
          _
        $region40: #{base_transform_forward.1} parent=11 // pred_fallthru
          _
      $region12: #{base_transform_forward.1} parent=5 // pred_fallthru
        _
      %p328 = scmp.lt.s32.totalorder %s19, 4
      // Predicated region
      $region41: #{base_transform_forward.1} parent=5 // pred_check
        %p329 = pneg %p328
      $region42: #{base_transform_forward.1} parent=5 // pred_check_branch
        %331 = sbr.rel (%p329) target = $region44
      $region43: #{base_transform_forward.1} parent=5 // pred_region
        // Predicated region
        $region45: #{base_transform_forward.1} parent=43 // pred_check
          %p332 = pneg %p156
        $region46: #{base_transform_forward.1} parent=43 // pred_check_branch
          %334 = sbr.rel (%p332) target = $region48
        $region47: #{base_transform_forward.1} parent=43 // pred_region
          %p335 = scmp.lt.s32.totalorder %s26, 1
          %s336 = scalar_select %p335, %s26, 1
          %s337 = smul.addr %s336, 4
          %s338 = scalar_lea.vmem %s5, %s337
        $region48: #{base_transform_forward.1} parent=43 // pred_fallthru
          _
      $region44: #{base_transform_forward.1} parent=5 // pred_fallthru
        _
      %p339 = scmp.le.s32.totalorder 1, %s19
      %p340 = scmp.lt.s32.totalorder %s19, 5
      %p341 = pnand %p339, %p340
      %p342 = pneg %p341
      // Predicated region
      $region49: #{base_transform_forward.1} parent=5 // pred_check
        _
      $region50: #{base_transform_forward.1} parent=5 // pred_check_branch
        %344 = sbr.rel (%p341) target = $region52
      $region51: #{base_transform_forward.1} parent=5 // pred_region
        %s345 = ssub.s32 %s19, 1
        // Predicated region
        $region53: #{base_transform_forward.1} parent=51 // pred_check
          %p346 = pneg %p52
        $region54: #{base_transform_forward.1} parent=51 // pred_check_branch
          %348 = sbr.rel (%p346) target = $region56
        $region55: #{base_transform_forward.1} parent=51 // pred_region
          %349 = dma.done [#allocation3], 64
        $region56: #{base_transform_forward.1} parent=51 // pred_fallthru
          _
        // Predicated region
        $region57: #{base_transform_forward.1} parent=51 // pred_check
          %p350 = pneg %p73
        $region58: #{base_transform_forward.1} parent=51 // pred_check_branch
          %352 = sbr.rel (%p350) target = $region60
        $region59: #{base_transform_forward.1} parent=51 // pred_region
          %353 = dma.done [#allocation5], 64
        $region60: #{base_transform_forward.1} parent=51 // pred_fallthru
          _
        // Predicated region
        $region61: #{base_transform_forward.1} parent=51 // pred_check
          %p354 = pneg %p94
        $region62: #{base_transform_forward.1} parent=51 // pred_check_branch
          %356 = sbr.rel (%p354) target = $region64
        $region63: #{base_transform_forward.1} parent=51 // pred_region
          %357 = dma.done [#allocation5], 64
        $region64: #{base_transform_forward.1} parent=51 // pred_fallthru
          _
        // Predicated region
        $region65: #{base_transform_forward.1} parent=51 // pred_check
          %p358 = pneg %p115
        $region66: #{base_transform_forward.1} parent=51 // pred_check_branch
          %360 = sbr.rel (%p358) target = $region68
        $region67: #{base_transform_forward.1} parent=51 // pred_region
          %361 = dma.done [#allocation8], 64
        $region68: #{base_transform_forward.1} parent=51 // pred_fallthru
          _
        %362 = sfence
        %p363 = pneg %p52
        %p364 = pneg %p49
        %p365 = pneg %p73
        %p366 = pneg %p70
        %p367 = pneg %p94
        %p368 = pneg %p91
        %p369 = pneg %p115
        %p370 = pneg %p112
        %p371 = pneg %p136
        %p372 = pneg %p133
        %p373 = scmp.lt.s32.totalorder %s28, 1
        %s374 = scalar_select %p373, %s28, 1
        %s375 = smul.addr %s374, 4
        %s376 = scalar_lea.vmem %s5, %s375
        %p377 = pneg %p162
        %p378 = pneg %p159
        %p379 = pneg %p183
        %p380 = pneg %p180
        %p381 = pneg %p204
        %p382 = pneg %p201
        %p383 = pneg %p232
        %p384 = pneg %p229
        %p385 = scmp.lt.s32.totalorder %s28, 1
        %s386 = scalar_select %p385, %s28, 1
        %p387 = scmp.lt.s32.totalorder %s29, 1
        %s388 = scalar_select %p387, %s29, 1
        %s389 = smul.addr %s386, 2
        %s390 = sadd.s32 %s388, %s389
        %s391 = smul.addr %s390, 8
        %s392 = scalar_lea.vmem %s8, %s391
        %p393 = pneg %p260
        %p394 = pneg %p257
        %p395 = scmp.lt.s32.totalorder %s28, 1
        %s396 = scalar_select %p395, %s28, 1
        %p397 = scmp.lt.s32.totalorder %s29, 1
        %s398 = scalar_select %p397, %s29, 1
        %s399 = smul.addr %s398, 2
        %s400 = smul.addr %s396, 4
        %s401 = sadd.s32 %s399, %s400
        %s402 = smul.addr %s401, 4
        %s403 = scalar_lea.vmem %s9, %s402
        %p404 = scmp.lt.s32.totalorder %s28, 1
        %s405 = scalar_select %p404, %s28, 1
        %s406 = smul.addr %s405, 4
        %s407 = scalar_lea.vmem %s5, %s406
        %p408 = scmp.lt.s32.totalorder %s28, 1
        %s409 = scalar_select %p408, %s28, 1
        %p410 = scmp.lt.s32.totalorder %s29, 1
        %s411 = scalar_select %p410, %s29, 1
        %s412 = smul.addr %s409, 2
        %s413 = sadd.s32 %s411, %s412
        %s414 = smul.addr %s413, 8
        %s415 = scalar_lea.vmem %s8, %s414
        %p416 = scmp.lt.s32.totalorder %s28, 1
        %s417 = scalar_select %p416, %s28, 1
        %p418 = scmp.lt.s32.totalorder %s29, 1
        %s419 = scalar_select %p418, %s29, 1
        %s420 = smul.addr %s419, 2
        %s421 = smul.addr %s417, 4
        %s422 = sadd.s32 %s420, %s421
        %s423 = smul.addr %s422, 4
        %s424 = scalar_lea.vmem %s9, %s423
        %s425 = smul.u32 %s29, 128
        %v426 = vld [vmem:[%s4] sm:$0x1]
        %v427 = vld [vmem:[%s4 + $0x1] sm:$0x1]
        %v428 = vld [vmem:[%s4 + $0x2] sm:$0x1]
        %v429 = vlaneseq
        %v430 = vshrl.u32 %v429, 7
        %v431 = vadd.s32 %v430, 8
        %v432 = vadd.s32 %v430, 16
        %v433 = vadd.s32 %v430, 24
        %v434 = vadd.s32 %v430, 32
        %v435 = vadd.s32 %v430, 40
        %v436 = vadd.s32 %v430, 48
        %v437 = vadd.s32 %v430, 56
        %v438 = vadd.s32 %v430, 64
        %v439 = vadd.s32 %v430, 72
        %v440 = vadd.s32 %v430, 80
        %v441 = vadd.s32 %v430, 88
        %v442 = vadd.s32 %v430, 96
        %v443 = vadd.s32 %v430, 104
        %v444 = vadd.s32 %v430, 112
        %v445 = vadd.s32 %v430, 120
        %v446 = vstv %s425
        %v447 = vadd.s32 %v430, %v446
        %v448 = vadd.s32 %v431, %v446
        %v449 = vadd.s32 %v432, %v446
        %v450 = vadd.s32 %v433, %v446
        %v451 = vadd.s32 %v434, %v446
        %v452 = vadd.s32 %v435, %v446
        %v453 = vadd.s32 %v436, %v446
        %v454 = vadd.s32 %v437, %v446
        %v455 = vadd.s32 %v438, %v446
        %v456 = vadd.s32 %v439, %v446
        %v457 = vadd.s32 %v440, %v446
        %v458 = vadd.s32 %v441, %v446
        %v459 = vadd.s32 %v442, %v446
        %v460 = vadd.s32 %v443, %v446
        %v461 = vadd.s32 %v444, %v446
        %v462 = vadd.s32 %v445, %v446
        %v463 = vld [vmem:[%s407] sm:$0xf]
        %v464 = vld [vmem:[%s7] sm:$0xff]
        %v465 = vld [vmem:[%s6] sm:$0xff]
        %467 = vset.pattern.permute.xlu0 0
        %468 = vperm.xlu0 %467, %v465
        %v469 = vpop.permute.xlu0 %468
        %v471 = vlaneseq
        %v472 = vshrl.u32 %v471, 7
        %v473 = vsub.s32 0, %v472
        %v474 = vrot.slane %v463, %v473
        %v475 = vmul.f32 %v469, %v474
        %477 = vset.pattern.permute.xlu0 0
        %478 = vperm.xlu0 %477, %v464
        %v479 = vpop.permute.xlu0 %478
        %v481 = vadd.f32 %v479, %v475
        %482 = vset.pattern.permute.xlu0 1
        %483 = vperm.xlu0 %482, %v465
        %v484 = vpop.permute.xlu0 %483
        %v486 = vlaneseq
        %v487 = vshrl.u32 %v486, 7
        %v488 = vsub.s32 1, %v487
        %v489 = vrot.slane %v463, %v488
        %v490 = vmul.f32 %v484, %v489
        %v491 = vadd.f32 %v481, %v490
        %492 = vset.pattern.permute.xlu0 2
        %493 = vperm.xlu0 %492, %v465
        %v494 = vpop.permute.xlu0 %493
        %v496 = vlaneseq
        %v497 = vshrl.u32 %v496, 7
        %v498 = vsub.s32 2, %v497
        %v499 = vrot.slane %v463, %v498
        %v500 = vmul.f32 %v494, %v499
        %v501 = vadd.f32 %v491, %v500
        %502 = vset.pattern.permute.xlu0 3
        %503 = vperm.xlu0 %502, %v465
        %v504 = vpop.permute.xlu0 %503
        %v506 = vlaneseq
        %v507 = vshrl.u32 %v506, 7
        %v508 = vsub.s32 3, %v507
        %v509 = vrot.slane %v463, %v508
        %v510 = vmul.f32 %v504, %v509
        %v511 = vadd.f32 %v501, %v510
        %s512 = smul.u32 %s28, 2
        %s513 = smul.u32 %s512, 128
        %s514 = sld [smem:[#allocation6 + %s513]]
        %v515 = vstv %s514
        %v516 = vsub.f32 %v426, %v515
        %s517 = sadd.s32 %s513, 1
        %s518 = sld [smem:[#allocation6 + %s517]]
        %v519 = vstv %s518
        %v520 = vsub.f32 %v427, %v519
        %s521 = sadd.s32 %s513, 2
        %s522 = sld [smem:[#allocation6 + %s521]]
        %v523 = vstv %s522
        %v524 = vsub.f32 %v428, %v523
        %s525 = sld [smem:[#allocation2 + %s513]]
        %v526 = vstv %s525
        %v527 = vmul.f32 %v526, %v516
        %s528 = sld [smem:[#allocation2 + %s517]]
        %v529 = vstv %s528
        %v530 = vmul.f32 %v529, %v520
        %v531 = vadd.f32 %v527, %v530
        %s532 = sld [smem:[#allocation2 + %s521]]
        %v533 = vstv %s532
        %v534 = vmul.f32 %v533, %v524
        %v535 = vadd.f32 %v531, %v534
        %s536 = sadd.s32 %s513, 3
        %s537 = sld [smem:[#allocation2 + %s536]]
        %v538 = vstv %s537
        %v539 = vmul.f32 %v538, %v516
        %s540 = sadd.s32 %s513, 4
        %s541 = sld [smem:[#allocation2 + %s540]]
        %v542 = vstv %s541
        %v543 = vmul.f32 %v542, %v520
        %v544 = vadd.f32 %v539, %v543
        %s545 = sadd.s32 %s513, 5
        %s546 = sld [smem:[#allocation2 + %s545]]
        %v547 = vstv %s546
        %v548 = vmul.f32 %v547, %v524
        %v549 = vadd.f32 %v544, %v548
        %s550 = sadd.s32 %s513, 6
        %s551 = sld [smem:[#allocation2 + %s550]]
        %v552 = vstv %s551
        %v553 = vmul.f32 %v552, %v516
        %s554 = sadd.s32 %s513, 7
        %s555 = sld [smem:[#allocation2 + %s554]]
        %v556 = vstv %s555
        %v557 = vmul.f32 %v556, %v520
        %v558 = vadd.f32 %v553, %v557
        %s559 = sadd.s32 %s513, 8
        %s560 = sld [smem:[#allocation2 + %s559]]
        %v561 = vstv %s560
        %v562 = vmul.f32 %v561, %v524
        %v563 = vadd.f32 %v558, %v562
        %v564 = vmul.f32 %v535, %v563
        %v565 = vmul.f32 %v549, %v563
        %s566 = sld [smem:[#allocation4 + %s513]]
        %v567 = vstv %s566
        %v568 = vmul.f32 %v567, %v564
        %s569 = sld [smem:[#allocation4 + %s517]]
        %v570 = vstv %s569
        %v571 = vmul.f32 %v570, %v565
        %v572 = vadd.f32 %v568, %v571
        %s573 = sld [smem:[#allocation4 + %s521]]
        %v574 = vstv %s573
        %v575 = vmul.f32 %v574, %v563
        %v576 = vadd.f32 %v572, %v575
        %s577 = sld [smem:[#allocation7 + %s513]]
        %v578 = vstv %s577
        %v579 = vadd.f32 %v576, %v578
        %s580 = sld [smem:[#allocation4 + %s536]]
        %v581 = vstv %s580
        %v582 = vmul.f32 %v581, %v564
        %s583 = sld [smem:[#allocation4 + %s540]]
        %v584 = vstv %s583
        %v585 = vmul.f32 %v584, %v565
        %v586 = vadd.f32 %v582, %v585
        %s587 = sld [smem:[#allocation4 + %s545]]
        %v588 = vstv %s587
        %v589 = vmul.f32 %v588, %v563
        %v590 = vadd.f32 %v586, %v589
        %s591 = sld [smem:[#allocation7 + %s517]]
        %v592 = vstv %s591
        %v593 = vadd.f32 %v590, %v592
        %s594 = sld [smem:[#allocation4 + %s550]]
        %v595 = vstv %s594
        %v596 = vmul.f32 %v595, %v564
        %s597 = sld [smem:[#allocation4 + %s554]]
        %v598 = vstv %s597
        %v599 = vmul.f32 %v598, %v565
        %v600 = vadd.f32 %v596, %v599
        %s601 = sld [smem:[#allocation4 + %s559]]
        %v602 = vstv %s601
        %v603 = vmul.f32 %v602, %v563
        %v604 = vadd.f32 %v600, %v603
        %s605 = sld [smem:[#allocation7 + %s521]]
        %v606 = vstv %s605
        %v607 = vadd.f32 %v604, %v606
        %v609 = vrot.slane %v593, 7
        %v612 = vrot.slane %v607, 6
        %vm614 = vcmask 1040384
        %v615 = vsel %vm614, %v579, %v609
        %vm616 = vcmask 1041408
        %v617 = vsel %vm616, %v615, %v612
        %618 = vst [vmem:[%s424] sm:$0x7] %v617
        %v619 = vsub.f32 %v579, -8.0
        %v620 = vcvt.f32.s32.to.zero.pseudo %v619
        %v621 = vsub.f32 %v593, -8.0
        %v622 = vcvt.f32.s32.to.zero.pseudo %v621
        %v623 = vsub.f32 %v607, -20.0
        %v624 = vmul.f32 %v623, 0.025
        %v625 = vcvt.f32.s32.to.zero.pseudo %v624
        %vm626 = vcmp.ge.s32.totalorder %v620, 0
        %vm627 = vcmp.lt.s32.totalorder %v620, 16
        %vm628 = vmand %vm626, %vm627
        %vm629 = vcmp.ge.s32.totalorder %v622, 0
        %vm630 = vmand %vm628, %vm629
        %vm631 = vcmp.lt.s32.totalorder %v622, 16
        %vm632 = vmand %vm630, %vm631
        %vm633 = vcmp.ge.s32.totalorder %v625, 0
        %vm634 = vmand %vm632, %vm633
        %vm635 = vcmp.lt.s32.totalorder %v625, 1
        %vm636 = vmand %vm634, %vm635
        %v637 = vmul.u32 %v625, 16
        %v638 = vadd.s32 %v637, %v620
        %v639 = vmul.u32 %v638, 16
        %v640 = vadd.s32 %v639, %v622
        %v641 = vsel %vm636, %v640, 4294967295
        %v642 = vlaneseq
        %v643 = vshrl.u32 %v642, 7
        %v644 = vsub.s32 0, %v643
        %v645 = vrot.slane %v641, %v644
        %vm646 = vcmp.eq.s32.totalorder %v645, %v447
        %vm647 = vcmp.eq.s32.totalorder %v645, %v448
        %vm648 = vcmp.eq.s32.totalorder %v645, %v449
        %vm649 = vcmp.eq.s32.totalorder %v645, %v450
        %vm650 = vcmp.eq.s32.totalorder %v645, %v451
        %vm651 = vcmp.eq.s32.totalorder %v645, %v452
        %vm652 = vcmp.eq.s32.totalorder %v645, %v453
        %vm653 = vcmp.eq.s32.totalorder %v645, %v454
        %vm654 = vcmp.eq.s32.totalorder %v645, %v455
        %vm655 = vcmp.eq.s32.totalorder %v645, %v456
        %vm656 = vcmp.eq.s32.totalorder %v645, %v457
        %vm657 = vcmp.eq.s32.totalorder %v645, %v458
        %vm658 = vcmp.eq.s32.totalorder %v645, %v459
        %vm659 = vcmp.eq.s32.totalorder %v645, %v460
        %vm660 = vcmp.eq.s32.totalorder %v645, %v461
        %vm661 = vcmp.eq.s32.totalorder %v645, %v462
        %v662 = vsel %vm646, 1, 0
        %v663 = vsel %vm647, 1, 0
        %v664 = vsel %vm648, 1, 0
        %v665 = vsel %vm649, 1, 0
        %v666 = vsel %vm650, 1, 0
        %v667 = vsel %vm651, 1, 0
        %v668 = vsel %vm652, 1, 0
        %v669 = vsel %vm653, 1, 0
        %v670 = vsel %vm654, 1, 0
        %v671 = vsel %vm655, 1, 0
        %v672 = vsel %vm656, 1, 0
        %v673 = vsel %vm657, 1, 0
        %v674 = vsel %vm658, 1, 0
        %v675 = vsel %vm659, 1, 0
        %v676 = vsel %vm660, 1, 0
        %v677 = vsel %vm661, 1, 0
        %v678 = vcvt.s32.f32 %v662
        %v679 = vcvt.s32.f32 %v663
        %v680 = vcvt.s32.f32 %v664
        %v681 = vcvt.s32.f32 %v665
        %v682 = vcvt.s32.f32 %v666
        %v683 = vcvt.s32.f32 %v667
        %v684 = vcvt.s32.f32 %v668
        %v685 = vcvt.s32.f32 %v669
        %v686 = vcvt.s32.f32 %v670
        %v687 = vcvt.s32.f32 %v671
        %v688 = vcvt.s32.f32 %v672
        %v689 = vcvt.s32.f32 %v673
        %v690 = vcvt.s32.f32 %v674
        %v691 = vcvt.s32.f32 %v675
        %v692 = vcvt.s32.f32 %v676
        %v693 = vcvt.s32.f32 %v677
        %695 = vrot.lane.b32.xlu0 %v511, 32
        %v696 = vpop.permute.xlu0 %695
        %698 = vrot.lane.b32.xlu0 %v511, 64
        %v699 = vpop.permute.xlu0 %698
        %701 = vrot.lane.b32.xlu0 %v511, 96
        %v702 = vpop.permute.xlu0 %701
        %vm704 = vcmask 261120
        %v705 = vsel %vm704, %v511, %v696
        %vm706 = vcmask 523264
        %v707 = vsel %vm706, %v705, %v699
        %vm708 = vcmask 785408
        %v709 = vsel %vm708, %v707, %v702
        %s710 = sadd.s32 %s512, 1
        %s711 = smul.u32 %s710, 128
        %s712 = sld [smem:[#allocation6 + %s711]]
        %v713 = vstv %s712
        %v714 = vsub.f32 %v426, %v713
        %s715 = sadd.s32 %s711, 1
        %s716 = sld [smem:[#allocation6 + %s715]]
        %v717 = vstv %s716
        %v718 = vsub.f32 %v427, %v717
        %s719 = sadd.s32 %s711, 2
        %s720 = sld [smem:[#allocation6 + %s719]]
        %v721 = vstv %s720
        %v722 = vsub.f32 %v428, %v721
        %s723 = sld [smem:[#allocation2 + %s711]]
        %v724 = vstv %s723
        %v725 = vmul.f32 %v724, %v714
        %s726 = sld [smem:[#allocation2 + %s715]]
        %v727 = vstv %s726
        %v728 = vmul.f32 %v727, %v718
        %v729 = vadd.f32 %v725, %v728
        %s730 = sld [smem:[#allocation2 + %s719]]
        %v731 = vstv %s730
        %v732 = vmul.f32 %v731, %v722
        %v733 = vadd.f32 %v729, %v732
        %s734 = sadd.s32 %s711, 3
        %s735 = sld [smem:[#allocation2 + %s734]]
        %v736 = vstv %s735
        %v737 = vmul.f32 %v736, %v714
        %s738 = sadd.s32 %s711, 4
        %s739 = sld [smem:[#allocation2 + %s738]]
        %v740 = vstv %s739
        %v741 = vmul.f32 %v740, %v718
        %v742 = vadd.f32 %v737, %v741
        %s743 = sadd.s32 %s711, 5
        %s744 = sld [smem:[#allocation2 + %s743]]
        %v745 = vstv %s744
        %v746 = vmul.f32 %v745, %v722
        %v747 = vadd.f32 %v742, %v746
        %s748 = sadd.s32 %s711, 6
        %s749 = sld [smem:[#allocation2 + %s748]]
        %v750 = vstv %s749
        %v751 = vmul.f32 %v750, %v714
        %s752 = sadd.s32 %s711, 7
        %s753 = sld [smem:[#allocation2 + %s752]]
        %v754 = vstv %s753
        %v755 = vmul.f32 %v754, %v718
        %v756 = vadd.f32 %v751, %v755
        %s757 = sadd.s32 %s711, 8
        %s758 = sld [smem:[#allocation2 + %s757]]
        %v759 = vstv %s758
        %v760 = vmul.f32 %v759, %v722
        %v761 = vadd.f32 %v756, %v760
        %v762 = vmul.f32 %v733, %v761
        %v763 = vmul.f32 %v747, %v761
        %s764 = sld [smem:[#allocation4 + %s711]]
        %v765 = vstv %s764
        %v766 = vmul.f32 %v765, %v762
        %s767 = sld [smem:[#allocation4 + %s715]]
        %v768 = vstv %s767
        %v769 = vmul.f32 %v768, %v763
        %v770 = vadd.f32 %v766, %v769
        %s771 = sld [smem:[#allocation4 + %s719]]
        %v772 = vstv %s771
        %v773 = vmul.f32 %v772, %v761
        %v774 = vadd.f32 %v770, %v773
        %s775 = sld [smem:[#allocation7 + %s711]]
        %v776 = vstv %s775
        %v777 = vadd.f32 %v774, %v776
        %s778 = sld [smem:[#allocation4 + %s734]]
        %v779 = vstv %s778
        %v780 = vmul.f32 %v779, %v762
        %s781 = sld [smem:[#allocation4 + %s738]]
        %v782 = vstv %s781
        %v783 = vmul.f32 %v782, %v763
        %v784 = vadd.f32 %v780, %v783
        %s785 = sld [smem:[#allocation4 + %s743]]
        %v786 = vstv %s785
        %v787 = vmul.f32 %v786, %v761
        %v788 = vadd.f32 %v784, %v787
        %s789 = sld [smem:[#allocation7 + %s715]]
        %v790 = vstv %s789
        %v791 = vadd.f32 %v788, %v790
        %s792 = sld [smem:[#allocation4 + %s748]]
        %v793 = vstv %s792
        %v794 = vmul.f32 %v793, %v762
        %s795 = sld [smem:[#allocation4 + %s752]]
        %v796 = vstv %s795
        %v797 = vmul.f32 %v796, %v763
        %v798 = vadd.f32 %v794, %v797
        %s799 = sld [smem:[#allocation4 + %s757]]
        %v800 = vstv %s799
        %v801 = vmul.f32 %v800, %v761
        %v802 = vadd.f32 %v798, %v801
        %s803 = sld [smem:[#allocation7 + %s719]]
        %v804 = vstv %s803
        %v805 = vadd.f32 %v802, %v804
        %v807 = vrot.slane %v791, 7
        %v810 = vrot.slane %v805, 6
        %v812 = vsel %vm614, %v777, %v807
        %v813 = vsel %vm616, %v812, %v810
        %s814 = scalar_lea.vmem %s424, 4
        %815 = vst [vmem:[%s814] sm:$0x7] %v813
        %v816 = vsub.f32 %v777, -8.0
        %v817 = vcvt.f32.s32.to.zero.pseudo %v816
        %v818 = vsub.f32 %v791, -8.0
        %v819 = vcvt.f32.s32.to.zero.pseudo %v818
        %v820 = vsub.f32 %v805, -20.0
        %v821 = vmul.f32 %v820, 0.025
        %v822 = vcvt.f32.s32.to.zero.pseudo %v821
        %vm823 = vcmp.ge.s32.totalorder %v817, 0
        %vm824 = vcmp.lt.s32.totalorder %v817, 16
        %vm825 = vmand %vm823, %vm824
        %vm826 = vcmp.ge.s32.totalorder %v819, 0
        %vm827 = vmand %vm825, %vm826
        %vm828 = vcmp.lt.s32.totalorder %v819, 16
        %vm829 = vmand %vm827, %vm828
        %vm830 = vcmp.ge.s32.totalorder %v822, 0
        %vm831 = vmand %vm829, %vm830
        %vm832 = vcmp.lt.s32.totalorder %v822, 1
        %vm833 = vmand %vm831, %vm832
        %v834 = vmul.u32 %v822, 16
        %v835 = vadd.s32 %v834, %v817
        %v836 = vmul.u32 %v835, 16
        %v837 = vadd.s32 %v836, %v819
        %v838 = vsel %vm833, %v837, 4294967295
        %v839 = vlaneseq
        %v840 = vshrl.u32 %v839, 7
        %v841 = vsub.s32 0, %v840
        %v842 = vrot.slane %v838, %v841
        %vm843 = vcmp.eq.s32.totalorder %v842, %v447
        %vm844 = vcmp.eq.s32.totalorder %v842, %v448
        %vm845 = vcmp.eq.s32.totalorder %v842, %v449
        %vm846 = vcmp.eq.s32.totalorder %v842, %v450
        %vm847 = vcmp.eq.s32.totalorder %v842, %v451
        %vm848 = vcmp.eq.s32.totalorder %v842, %v452
        %vm849 = vcmp.eq.s32.totalorder %v842, %v453
        %vm850 = vcmp.eq.s32.totalorder %v842, %v454
        %vm851 = vcmp.eq.s32.totalorder %v842, %v455
        %vm852 = vcmp.eq.s32.totalorder %v842, %v456
        %vm853 = vcmp.eq.s32.totalorder %v842, %v457
        %vm854 = vcmp.eq.s32.totalorder %v842, %v458
        %vm855 = vcmp.eq.s32.totalorder %v842, %v459
        %vm856 = vcmp.eq.s32.totalorder %v842, %v460
        %vm857 = vcmp.eq.s32.totalorder %v842, %v461
        %vm858 = vcmp.eq.s32.totalorder %v842, %v462
        %v859 = vsel %vm843, 1, 0
        %v860 = vsel %vm844, 1, 0
        %v861 = vsel %vm845, 1, 0
        %v862 = vsel %vm846, 1, 0
        %v863 = vsel %vm847, 1, 0
        %v864 = vsel %vm848, 1, 0
        %v865 = vsel %vm849, 1, 0
        %v866 = vsel %vm850, 1, 0
        %v867 = vsel %vm851, 1, 0
        %v868 = vsel %vm852, 1, 0
        %v869 = vsel %vm853, 1, 0
        %v870 = vsel %vm854, 1, 0
        %v871 = vsel %vm855, 1, 0
        %v872 = vsel %vm856, 1, 0
        %v873 = vsel %vm857, 1, 0
        %v874 = vsel %vm858, 1, 0
        %v875 = vcvt.s32.f32 %v859
        %v876 = vcvt.s32.f32 %v860
        %v877 = vcvt.s32.f32 %v861
        %v878 = vcvt.s32.f32 %v862
        %v879 = vcvt.s32.f32 %v863
        %v880 = vcvt.s32.f32 %v864
        %v881 = vcvt.s32.f32 %v865
        %v882 = vcvt.s32.f32 %v866
        %v883 = vcvt.s32.f32 %v867
        %v884 = vcvt.s32.f32 %v868
        %v885 = vcvt.s32.f32 %v869
        %v886 = vcvt.s32.f32 %v870
        %v887 = vcvt.s32.f32 %v871
        %v888 = vcvt.s32.f32 %v872
        %v889 = vcvt.s32.f32 %v873
        %v890 = vcvt.s32.f32 %v874
        %v891 = vsel %vm704, %v702, %v511
        %v892 = vsel %vm706, %v891, %v696
        %v893 = vsel %vm708, %v892, %v699
        %894 = vmatprep.subr.mxu0 %v875
        %895 = vmatpush1.xpose.msra.mxu0 %v678
        %896 = vmatprep.subr.mxu0 %v876
        %897 = vmatpush1.xpose.msra.mxu0 %v679
        %898 = vmatprep.subr.mxu0 %v877
        %899 = vmatpush1.xpose.msra.mxu0 %v680
        %900 = vmatprep.subr.mxu0 %v878
        %901 = vmatpush1.xpose.msra.mxu0 %v681
        %902 = vmatprep.subr.mxu0 %v879
        %903 = vmatpush1.xpose.msra.mxu0 %v682
        %904 = vmatprep.subr.mxu0 %v880
        %905 = vmatpush1.xpose.msra.mxu0 %v683
        %906 = vmatprep.subr.mxu0 %v881
        %907 = vmatpush1.xpose.msra.mxu0 %v684
        %908 = vmatprep.subr.mxu0 %v882
        %909 = vmatpush1.xpose.msra.mxu0 %v685
        %910 = vmatprep.subr.mxu0 %v883
        %911 = vmatpush1.xpose.msra.mxu0 %v686
        %912 = vmatprep.subr.mxu0 %v884
        %913 = vmatpush1.xpose.msra.mxu0 %v687
        %914 = vmatprep.subr.mxu0 %v885
        %915 = vmatpush1.xpose.msra.mxu0 %v688
        %916 = vmatprep.subr.mxu0 %v886
        %917 = vmatpush1.xpose.msra.mxu0 %v689
        %918 = vmatprep.subr.mxu0 %v887
        %919 = vmatpush1.xpose.msra.mxu0 %v690
        %920 = vmatprep.subr.mxu0 %v888
        %921 = vmatpush1.xpose.msra.mxu0 %v691
        %922 = vmatprep.subr.mxu0 %v889
        %923 = vmatpush1.xpose.msra.mxu0 %v692
        %924 = vmatprep.subr.mxu0 %v890
        %925 = vmatpush1.xpose.msra.mxu0 %v693
        %926 = vmatprep.subr.mxu0 0.0
        %927 = vmatpush1.xpose.msra.mxu0 0.0
        %928 = vmatprep.subr.mxu0 0.0
        %929 = vmatpush1.xpose.msra.mxu0 0.0
        %930 = vmatprep.subr.mxu0 0.0
        %931 = vmatpush1.xpose.msra.mxu0 0.0
        %932 = vmatprep.subr.mxu0 0.0
        %933 = vmatpush1.xpose.msra.mxu0 0.0
        %934 = vmatprep.subr.mxu0 0.0
        %935 = vmatpush1.xpose.msra.mxu0 0.0
        %936 = vmatprep.subr.mxu0 0.0
        %937 = vmatpush1.xpose.msra.mxu0 0.0
        %938 = vmatprep.subr.mxu0 0.0
        %939 = vmatpush1.xpose.msra.mxu0 0.0
        %940 = vmatprep.subr.mxu0 0.0
        %941 = vmatpush1.xpose.msra.mxu0 0.0
        %942 = vmatprep.subr.mxu0 0.0
        %943 = vmatpush1.xpose.msra.mxu0 0.0
        %944 = vmatprep.subr.mxu0 0.0
        %945 = vmatpush1.xpose.msra.mxu0 0.0
        %946 = vmatprep.subr.mxu0 0.0
        %947 = vmatpush1.xpose.msra.mxu0 0.0
        %948 = vmatprep.subr.mxu0 0.0
        %949 = vmatpush1.xpose.msra.mxu0 0.0
        %950 = vmatprep.subr.mxu0 0.0
        %951 = vmatpush1.xpose.msra.mxu0 0.0
        %952 = vmatprep.subr.mxu0 0.0
        %953 = vmatpush1.xpose.msra.mxu0 0.0
        %954 = vmatprep.subr.mxu0 0.0
        %955 = vmatpush1.xpose.msra.mxu0 0.0
        %956 = vmatprep.subr.mxu0 0.0
        %957 = vmatpush1.xpose.msra.mxu0 0.0
        %958 = vmatprep.mubr.f32.mxu0 %v893
        %959 = vmatmul.mubr.f32.gmra.mrb[0].mxu0 %v709
        %v960 = vpop.f32.mrb[0].mxu0
        %v961 = vadd.f32 0.0, %v960
        %v962 = vpop.f32.mrb[0].mxu0
        %963 = vdwg.mxu0
        %964 = vst [vmem:[%s415] sm:$0xff] %v961
        %p965 = scmp.lt.s32.totalorder %s28, 1
        %s966 = scalar_select %p965, %s28, 1
        %p967 = scmp.lt.s32.totalorder %s29, 1
        %s968 = scalar_select %p967, %s29, 1
        %s969 = smul.addr %s966, 2
        %s970 = sadd.s32 %s968, %s969
        %s971 = smul.addr %s970, 8
        %s972 = scalar_lea.vmem %s8, %s971
        %p973 = scmp.lt.s32.totalorder %s28, 1
        %s974 = scalar_select %p973, %s28, 1
        %p975 = scmp.lt.s32.totalorder %s29, 1
        %s976 = scalar_select %p975, %s29, 1
        %s977 = smul.addr %s976, 2
        %s978 = smul.addr %s974, 4
        %s979 = sadd.s32 %s977, %s978
        %s980 = smul.addr %s979, 4
        %s981 = scalar_lea.vmem %s9, %s980
        // Predicated region
        $region69: #{base_transform_forward.1} parent=51 // pred_check
          %p982 = pneg %p229
        $region70: #{base_transform_forward.1} parent=51 // pred_check_branch
          %984 = sbr.rel (%p982) target = $region72
        $region71: #{base_transform_forward.1} parent=51 // pred_region
          _
        $region72: #{base_transform_forward.1} parent=51 // pred_fallthru
          _
        // Predicated region
        $region73: #{base_transform_forward.1} parent=51 // pred_check
          %p985 = pneg %p257
        $region74: #{base_transform_forward.1} parent=51 // pred_check_branch
          %987 = sbr.rel (%p985) target = $region76
        $region75: #{base_transform_forward.1} parent=51 // pred_region
          _
        $region76: #{base_transform_forward.1} parent=51 // pred_fallthru
          _
      $region52: #{base_transform_forward.1} parent=5 // pred_fallthru
        _
      %p988 = scmp.le.s32.totalorder 2, %s19
      // Predicated region
      $region77: #{base_transform_forward.1} parent=5 // pred_check
        %p989 = pneg %p988
      $region78: #{base_transform_forward.1} parent=5 // pred_check_branch
        %991 = sbr.rel (%p989) target = $region80
      $region79: #{base_transform_forward.1} parent=5 // pred_region
        %s992 = ssub.s32 %s19, 2
        // Predicated region
        $region81: #{base_transform_forward.1} parent=79 // pred_check
          %p993 = pneg %p235
        $region82: #{base_transform_forward.1} parent=79 // pred_check_branch
          %995 = sbr.rel (%p993) target = $region84
        $region83: #{base_transform_forward.1} parent=79 // pred_region
          %p996 = scmp.lt.s32.totalorder %s30, 1
          %s997 = scalar_select %p996, %s30, 1
          %p998 = scmp.lt.s32.totalorder %s31, 1
          %s999 = scalar_select %p998, %s31, 1
          %s1000 = smul.addr %s997, 2
          %s1001 = sadd.s32 %s999, %s1000
          %s1002 = smul.addr %s1001, 8
          %s1003 = scalar_lea.vmem %s8, %s1002
        $region84: #{base_transform_forward.1} parent=79 // pred_fallthru
          _
        // Predicated region
        $region85: #{base_transform_forward.1} parent=79 // pred_check
          %p1004 = pneg %p263
        $region86: #{base_transform_forward.1} parent=79 // pred_check_branch
          %1006 = sbr.rel (%p1004) target = $region88
        $region87: #{base_transform_forward.1} parent=79 // pred_region
          %p1007 = scmp.lt.s32.totalorder %s30, 1
          %s1008 = scalar_select %p1007, %s30, 1
          %p1009 = scmp.lt.s32.totalorder %s31, 1
          %s1010 = scalar_select %p1009, %s31, 1
          %s1011 = smul.addr %s1010, 2
          %s1012 = smul.addr %s1008, 4
          %s1013 = sadd.s32 %s1011, %s1012
          %s1014 = smul.addr %s1013, 4
          %s1015 = scalar_lea.vmem %s9, %s1014
        $region88: #{base_transform_forward.1} parent=79 // pred_fallthru
          _
      $region80: #{base_transform_forward.1} parent=5 // pred_fallthru
        _
    $region6: #{base_transform_forward.1} parent=1 // loop_footer
      %s23 = sadd.s32 1, %s19
    $region7: #{base_transform_forward.1} parent=1 // loop_footer_branch
      %18 = sbr.rel target = $region3
    $region8: #{base_transform_forward.1} parent=1 // loop_exit
      _
    %1016 = vsyncpa [#allocation3], 1
    %s1017 = scalar_lea.sflag [#allocation3], 1
    %1018 = vsyncpa %s1017, 1
    %1019 = vsyncpa [#allocation5], 1
    %1020 = vsyncpa [#allocation8], 1

</llo_original>
